<compile_context>
chip_gen: v6e
topology: v6e:2x2x1
jax: 0.10.0
libtpu: 0.0.40
codegen_flags: <defaults>
</compile_context>

<pallas_src>
import math

import numpy as np
import jax
import jax.numpy as jnp
from jax import lax
from jax.experimental import pallas as pl
from jax.experimental.pallas import tpu as pltpu


# ----------------------------------------------------------------------------
# Host-side constants: spherical-harmonic atoms.
# TODO(synk): the spec's `spherical_harmonics` uses sympy.Ynm; it is replaced
# by closed-form numpy SH (physics convention, Condon-Shortley) for degree<=3.
# ----------------------------------------------------------------------------
def _assoc_legendre(n, m, x):
    s = np.sqrt(np.maximum(0.0, 1.0 - x * x))
    table = {
        (0, 0): lambda: np.ones_like(x),
        (1, 0): lambda: x,
        (1, 1): lambda: -s,
        (2, 0): lambda: 0.5 * (3.0 * x ** 2 - 1.0),
        (2, 1): lambda: -3.0 * x * s,
        (2, 2): lambda: 3.0 * s ** 2,
        (3, 0): lambda: 0.5 * (5.0 * x ** 3 - 3.0 * x),
        (3, 1): lambda: -1.5 * (5.0 * x ** 2 - 1.0) * s,
        (3, 2): lambda: 15.0 * x * s ** 2,
        (3, 3): lambda: -15.0 * s ** 3,
    }
    if (n, m) not in table:
        raise NotImplementedError("max_degree > 3 not supported in this demo")
    return table[(n, m)]()


def _spherical_harmonic(m, n, theta, phi):
    ma = abs(m)
    norm = math.sqrt((2 * n + 1) / (4.0 * math.pi)
                     * math.factorial(n - ma) / math.factorial(n + ma))
    y = norm * _assoc_legendre(n, ma, np.cos(theta)) * np.exp(1j * ma * phi)
    if m < 0:
        y = ((-1) ** ma) * np.conj(y)
    return y.astype(np.complex64)


def _tri(x):
    return np.maximum(0.0, 1.0 - np.abs(x))


def build_atoms(kernel_size, max_degree):
    """(ks, ks, ks, n_radial, n_harmonics) complex64 SH atoms.

    TODO(synk): the 'radial' SHConv3D subclass is not included in the spec;
    tri-shaped radial shells at radii 0..ks//2 are used for its `_atoms`.
    """
    half = kernel_size // 2
    g = np.linspace(-half, half, kernel_size)
    x, y, z = np.meshgrid(g, g, g, indexing="xy")
    r = np.sqrt(x ** 2 + y ** 2 + z ** 2)
    phi = np.arctan2(y, x)
    theta = np.arccos(np.divide(z, r, out=np.zeros_like(r), where=r != 0))

    n_harm = (max_degree + 1) ** 2
    sh = np.zeros(r.shape + (n_harm,), dtype=np.complex64)
    idx = 0
    for n in range(max_degree + 1):
        for m in range(-n, n + 1):
            sh[..., idx] = _spherical_harmonic(m, n, theta, phi)
            idx += 1
    profiles = np.stack([_tri(r - i) for i in range(half + 1)], axis=-1)
    atoms = profiles[..., :, None].astype(np.complex64) * sh[..., None, :]
    return atoms  # (ks, ks, ks, n_radial, n_harm)


# ----------------------------------------------------------------------------
# Parameters (deterministic, stand in for the torch-initialised nn.Parameters).
# ----------------------------------------------------------------------------
def init_params(key, in_channels, out_channels, max_degree, n_radial):
    L, F, C = max_degree, out_channels, in_channels
    c2 = (L + 1) * F
    k_w, k_wc, k_bc, k_b, k_wp, k_bp = jax.random.split(key, 6)
    limit = math.sqrt(6.0 / (C + F))
    limit_p = math.sqrt(6.0 / (c2 + F))
    return dict(
        w=jax.random.uniform(k_w, (C, F, n_radial, L + 1), jnp.float32, -limit, limit),
        wc=jax.random.uniform(k_wc, (F, C), jnp.float32, -limit, limit),  # central 1x1x1 conv
        bc=jax.random.uniform(k_bc, (F,), jnp.float32, -0.1, 0.1),
        bias=jax.random.uniform(k_b, (c2,), jnp.float32, -0.1, 0.1),      # SSHConv3D bias
        wp=jax.random.uniform(k_wp, (F, c2), jnp.float32, -limit_p, limit_p),  # proj conv
        bp=jax.random.uniform(k_bp, (F,), jnp.float32, -0.1, 0.1),
    )


# ----------------------------------------------------------------------------
# Fold atoms + w + central conv + spectrum reduction into dense matrices.
# ----------------------------------------------------------------------------
def fold_params(atoms, params, max_degree, in_channels, out_channels, lane=128):
    ks = atoms.shape[0]
    L, C, F = max_degree, in_channels, out_channels
    n_harm = (L + 1) ** 2
    R = atoms.shape[-2]
    n_off = ks ** 3
    deg = np.concatenate([np.full(2 * n + 1, n, dtype=np.int32) for n in range(L + 1)])

    w = np.asarray(params["w"], np.float32)                  # (C, F, R, L+1)
    wdeg = w[:, :, :, deg]                                   # (C, F, R, n_harm)
    a_re = np.real(atoms).reshape(n_off, R, n_harm).astype(np.float32)
    a_im = np.imag(atoms).reshape(n_off, R, n_harm).astype(np.float32)

    # combined filters, transposed for lane-dense kernel layout:
    #   row = harm*F + f, col = c*n_off + offset
    frt = np.einsum("krh,cfrh->hfck", a_re, wdeg).reshape(n_harm * F, C * n_off)
    fit = np.einsum("krh,cfrh->hfck", a_im, wdeg).reshape(n_harm * F, C * n_off)

    # fold central-pixel 1x1x1 conv into the harmonic-0 rows of the real part
    wc = np.asarray(params["wc"], np.float32)
    center = (ks // 2) * ks * ks + (ks // 2) * ks + (ks // 2)
    for f in range(F):
        for c in range(C):
            frt[f, c * n_off + center] += wc[f, c]

    k_pad = -(-(C * n_off) // lane) * lane
    frt_p = np.zeros((n_harm * F, k_pad), np.float32); frt_p[:, :C * n_off] = frt
    fit_p = np.zeros((n_harm * F, k_pad), np.float32); fit_p[:, :C * n_off] = fit

    br = np.zeros((n_harm * F, 1), np.float32)               # central conv bias
    br[:F, 0] = np.asarray(params["bc"], np.float32)

    # per-degree spectrum aggregation: out channel c2 = f*(L+1)+n
    c2 = (L + 1) * F
    at = np.zeros((c2, n_harm * F), np.float32)
    for h in range(n_harm):
        n = int(deg[h])
        for f in range(F):
            at[f * (L + 1) + n, h * F + f] = 1.0 / (2 * n + 1)

    return dict(
        frt=jnp.asarray(frt_p), fit=jnp.asarray(fit_p), br=jnp.asarray(br),
        at=jnp.asarray(at), b2=jnp.asarray(np.asarray(params["bias"], np.float32).reshape(c2, 1)),
        wpt=jnp.asarray(np.asarray(params["wp"], np.float32)),
        bp=jnp.asarray(np.asarray(params["bp"], np.float32).reshape(F, 1)),
        k_pad=k_pad, n_off=n_off)


# ----------------------------------------------------------------------------
# Pallas kernel: one grid step per batch element, everything lane-dense (.., P)
# ----------------------------------------------------------------------------
def _ssh_kernel(xt_ref, frt_ref, fit_ref, br_ref, at_ref, b2_ref, wpt_ref,
                bp_ref, o_ref):
    xt = xt_ref[...]                                                   # (Kp, P)
    real = jnp.dot(frt_ref[...], xt, preferred_element_type=jnp.float32) + br_ref[...]
    imag = jnp.dot(fit_ref[...], xt, preferred_element_type=jnp.float32)
    sq = real * real + imag * imag                                     # (NH*F, P)
    spect = jnp.dot(at_ref[...], sq, preferred_element_type=jnp.float32) + b2_ref[...]
    z = jnp.where(spect >= 0, 1.0, -1.0) * jnp.log(1.0 + jnp.abs(spect))
    proj = jnp.dot(wpt_ref[...], z, preferred_element_type=jnp.float32) + bp_ref[...]
    o_ref[...] = jnp.maximum(proj, 0.0).astype(o_ref.dtype)            # (F, P)


def ssh_conv3d(x, folded, kernel_size=3):
    B, C, D, H, W = x.shape
    ks = kernel_size
    pad = ks // 2
    P = D * H * W
    n_off = folded["n_off"]
    Kp = folded["k_pad"]
    NHF = folded["frt"].shape[0]
    C2 = folded["at"].shape[0]
    Fo = folded["wpt"].shape[0]

    # im2col in the wrapper (pure data movement) so the kernel sees a
    # lane-dense (Kp, D*H*W) operand; K zero-padded to a multiple of 128.
    xpad = jnp.pad(x, ((0, 0), (0, 0), (pad, pad), (pad, pad), (pad, pad)))
    slabs = []
    for kz in range(ks):
        for ky in range(ks):
            for kx in range(ks):
                slabs.append(xpad[:, :, kz:kz + D, ky:ky + H, kx:kx + W])
    pt = jnp.stack(slabs, axis=2).reshape(B, C * n_off, P)
    pt = jnp.pad(pt, ((0, 0), (0, Kp - C * n_off), (0, 0)))            # (B, Kp, P)

    out = pl.pallas_call(
        _ssh_kernel,
        out_shape=jax.ShapeDtypeStruct((B, Fo, P), jnp.float32),
        grid_spec=pltpu.PrefetchScalarGridSpec(
            num_scalar_prefetch=0,
            grid=(B,),
            in_specs=[
                pl.BlockSpec((None, Kp, P), lambda b: (b, 0, 0)),      # patches^T
                pl.BlockSpec((NHF, Kp), lambda b: (0, 0)),             # real filters
                pl.BlockSpec((NHF, Kp), lambda b: (0, 0)),             # imag filters
                pl.BlockSpec((NHF, 1), lambda b: (0, 0)),              # central bias
                pl.BlockSpec((C2, NHF), lambda b: (0, 0)),             # spectrum matrix
                pl.BlockSpec((C2, 1), lambda b: (0, 0)),               # SSH bias
                pl.BlockSpec((Fo, C2), lambda b: (0, 0)),              # proj weight
                pl.BlockSpec((Fo, 1), lambda b: (0, 0)),               # proj bias
            ],
            out_specs=pl.BlockSpec((None, Fo, P), lambda b: (b, 0, 0)),
        ),
        compiler_params=pltpu.CompilerParams(
            dimension_semantics=("parallel",)),
    )(pt, folded["frt"], folded["fit"], folded["br"], folded["at"],
      folded["b2"], folded["wpt"], folded["bp"])
    return out.reshape(B, Fo, D, H, W)


# ----------------------------------------------------------------------------
# Pure-JAX reference, following the torch forward structure (lax.conv based).
# ----------------------------------------------------------------------------
def reference_forward(x, atoms, params, max_degree):
    B, C, D, H, W = x.shape
    ks = atoms.shape[0]
    R = atoms.shape[-2]
    L = max_degree
    NH = (L + 1) ** 2
    F = params["wc"].shape[0]
    hp = lax.Precision.HIGHEST

    a_re = jnp.asarray(np.real(atoms).reshape(ks, ks, ks, R * NH)
                       .transpose(3, 0, 1, 2)[:, None])
    a_im = jnp.asarray(np.imag(atoms).reshape(ks, ks, ks, R * NH)
                       .transpose(3, 0, 1, 2)[:, None])
    dn = ("NCDHW", "OIDHW", "NCDHW")
    reals, imags = [], []
    for c in range(C):
        xc = x[:, c:c + 1]
        yr = lax.conv_general_dilated(xc, a_re, (1, 1, 1), "SAME",
                                      dimension_numbers=dn, precision=hp)
        yi = lax.conv_general_dilated(xc, a_im, (1, 1, 1), "SAME",
                                      dimension_numbers=dn, precision=hp)
        reals.append(jnp.moveaxis(yr, 1, -1))
        imags.append(jnp.moveaxis(yi, 1, -1))
    real_fm = jnp.stack(reals, axis=4).reshape(B, D, H, W, C, 1, R, NH)
    imag_fm = jnp.stack(imags, axis=4).reshape(B, D, H, W, C, 1, R, NH)

    deg = np.concatenate([np.full(2 * n + 1, n, dtype=np.int32) for n in range(L + 1)])
    w_rep = params["w"][:, :, :, deg][None, None, None, None]
    real_fm = jnp.sum(w_rep * real_fm, axis=(4, 6))                   # (B,D,H,W,F,NH)
    imag_fm = jnp.sum(w_rep * imag_fm, axis=(4, 6))

    central = jnp.einsum("fc,bcdhw->bdhwf", params["wc"], x, precision=hp) + params["bc"]
    real_fm = real_fm.at[..., 0].add(central)

    spect = []
    for n in range(L + 1):
        lo, hi = n * n, n * n + 2 * n + 1
        spect.append(jnp.sum(real_fm[..., lo:hi] ** 2 + imag_fm[..., lo:hi] ** 2,
                             axis=-1) / (2 * n + 1))
    spect = jnp.stack(spect, axis=-1)                                  # (B,D,H,W,F,L+1)
    xs = jnp.moveaxis(spect.reshape(B, D, H, W, F * (L + 1)), -1, 1)
    xs = xs + params["bias"].reshape(1, -1, 1, 1, 1)
    xs = jnp.sign(xs) * jnp.log(1.0 + jnp.abs(xs))
    out = jnp.einsum("oc,bcdhw->bodhw", params["wp"], xs, precision=hp)
    out = out + params["bp"].reshape(1, -1, 1, 1, 1)
    return jnp.maximum(out, 0.0)


if __name__ == "__main__":
    key = jax.random.PRNGKey(0)
    B, C, D, H, W = 2, 4, 8, 8, 8
    out_channels = 8          # -> n_harmonics * filters = 16*8 = 128 lanes of work
    max_degree = 3
    ks = 3

    atoms = build_atoms(ks, max_degree)            # (3,3,3,2,16) complex64
    n_radial = atoms.shape[-2]

    k_x, k_p = jax.random.split(key)
    x = jax.random.normal(k_x, (B, C, D, H, W), dtype=jnp.float32)
    params = init_params(k_p, C, out_channels, max_degree, n_radial)
    folded = fold_params(atoms, params, max_degree, C, out_channels)

    fwd = jax.jit(lambda inp: ssh_conv3d(inp, folded, kernel_size=ks))
    y = jax.block_until_ready(fwd(x))
    assert y.shape == (B, out_channels, D, H, W), y.shape

    ref = reference_forward(x, atoms, params, max_degree)
    err = float(jnp.max(jnp.abs(y - ref)))
    tol = 3e-2 * float(jnp.max(jnp.abs(ref))) + 3e-2
    assert err <= tol, f"max abs err {err} > tol {tol}"
    print("KERNEL_OK")
</pallas_src>

<mosaic_0001>
module attributes {stable_mosaic.version = 11 : i64} {
  func.func @_ssh_kernel(%arg0: i32, %arg1: memref<1x128x512xf32, #tpu.memory_space<vmem>>, %arg2: memref<128x128xf32, #tpu.memory_space<vmem>>, %arg3: memref<128x128xf32, #tpu.memory_space<vmem>>, %arg4: memref<128x1xf32, #tpu.memory_space<vmem>>, %arg5: memref<32x128xf32, #tpu.memory_space<vmem>>, %arg6: memref<32x1xf32, #tpu.memory_space<vmem>>, %arg7: memref<8x32xf32, #tpu.memory_space<vmem>>, %arg8: memref<8x1xf32, #tpu.memory_space<vmem>>, %arg9: memref<1x8x512xf32, #tpu.memory_space<vmem>>) attributes {dimension_semantics = [#tpu.dimension_semantics<parallel>], iteration_bounds = array<i64: 2>, scalar_prefetch = 0 : i64, scratch_operands = 0 : i64, tpu.core_type = #tpu.core_type<tc>, window_params = [{transform_indices = @transform_0, window_bounds = array<i64: 1, 128, 512>}, {pipeline_mode = #tpu.pipeline_mode<synchronous>, transform_indices = @transform_1, window_bounds = array<i64: 128, 128>}, {pipeline_mode = #tpu.pipeline_mode<synchronous>, transform_indices = @transform_2, window_bounds = array<i64: 128, 128>}, {pipeline_mode = #tpu.pipeline_mode<synchronous>, transform_indices = @transform_3, window_bounds = array<i64: 128, 1>}, {pipeline_mode = #tpu.pipeline_mode<synchronous>, transform_indices = @transform_4, window_bounds = array<i64: 32, 128>}, {pipeline_mode = #tpu.pipeline_mode<synchronous>, transform_indices = @transform_5, window_bounds = array<i64: 32, 1>}, {pipeline_mode = #tpu.pipeline_mode<synchronous>, transform_indices = @transform_6, window_bounds = array<i64: 8, 32>}, {pipeline_mode = #tpu.pipeline_mode<synchronous>, transform_indices = @transform_7, window_bounds = array<i64: 8, 1>}, {transform_indices = @transform_8, window_bounds = array<i64: 1, 8, 512>}]} {
    %c0 = arith.constant 0 : index
    %c0_0 = arith.constant 0 : index
    %c0_1 = arith.constant 0 : index
    %0 = vector.load %arg1[%c0, %c0_0, %c0_1] : memref<1x128x512xf32, #tpu.memory_space<vmem>>, vector<1x128x512xf32>
    %1 = vector.shape_cast %0 : vector<1x128x512xf32> to vector<128x512xf32>
    %c0_2 = arith.constant 0 : index
    %c0_3 = arith.constant 0 : index
    %2 = vector.load %arg2[%c0_2, %c0_3] : memref<128x128xf32, #tpu.memory_space<vmem>>, vector<128x128xf32>
    %cst = arith.constant dense<0.000000e+00> : vector<128x512xf32>
    %3 = tpu.matmul %2, %1, %cst {dimension_numbers = #tpu.dot_dimension_numbers<[1], [0], [0], [1], [0, 0, 1, 1], [], []>} : vector<128x128xf32>, vector<128x512xf32>, vector<128x512xf32> -> vector<128x512xf32>
    %c0_4 = arith.constant 0 : index
    %c0_5 = arith.constant 0 : index
    %4 = vector.load %arg4[%c0_4, %c0_5] : memref<128x1xf32, #tpu.memory_space<vmem>>, vector<128x1xf32>
    %5 = vector.broadcast %4 : vector<128x1xf32> to vector<128x512xf32>
    %6 = arith.addf %3, %5 : vector<128x512xf32>
    %c0_6 = arith.constant 0 : index
    %c0_7 = arith.constant 0 : index
    %7 = vector.load %arg3[%c0_6, %c0_7] : memref<128x128xf32, #tpu.memory_space<vmem>>, vector<128x128xf32>
    %cst_8 = arith.constant dense<0.000000e+00> : vector<128x512xf32>
    %8 = tpu.matmul %7, %1, %cst_8 {dimension_numbers = #tpu.dot_dimension_numbers<[1], [0], [0], [1], [0, 0, 1, 1], [], []>} : vector<128x128xf32>, vector<128x512xf32>, vector<128x512xf32> -> vector<128x512xf32>
    %9 = arith.mulf %6, %6 : vector<128x512xf32>
    %10 = arith.mulf %8, %8 : vector<128x512xf32>
    %11 = arith.addf %9, %10 : vector<128x512xf32>
    %c0_9 = arith.constant 0 : index
    %c0_10 = arith.constant 0 : index
    %12 = vector.load %arg5[%c0_9, %c0_10] : memref<32x128xf32, #tpu.memory_space<vmem>>, vector<32x128xf32>
    %cst_11 = arith.constant dense<0.000000e+00> : vector<32x512xf32>
    %13 = tpu.matmul %12, %11, %cst_11 {dimension_numbers = #tpu.dot_dimension_numbers<[1], [0], [0], [1], [0, 0, 1, 1], [], []>} : vector<32x128xf32>, vector<128x512xf32>, vector<32x512xf32> -> vector<32x512xf32>
    %c0_12 = arith.constant 0 : index
    %c0_13 = arith.constant 0 : index
    %14 = vector.load %arg6[%c0_12, %c0_13] : memref<32x1xf32, #tpu.memory_space<vmem>>, vector<32x1xf32>
    %15 = vector.broadcast %14 : vector<32x1xf32> to vector<32x512xf32>
    %16 = arith.addf %13, %15 : vector<32x512xf32>
    %cst_14 = arith.constant 0.000000e+00 : f32
    %17 = vector.broadcast %cst_14 : f32 to vector<32x512xf32>
    %18 = arith.cmpf oge, %16, %17 : vector<32x512xf32>
    %cst_15 = arith.constant 1.000000e+00 : f32
    %cst_16 = arith.constant -1.000000e+00 : f32
    %19 = vector.broadcast %cst_15 : f32 to vector<32x512xf32>
    %20 = vector.broadcast %cst_16 : f32 to vector<32x512xf32>
    %21 = arith.select %18, %19, %20 : vector<32x512xi1>, vector<32x512xf32>
    %22 = math.absf %16 : vector<32x512xf32>
    %cst_17 = arith.constant 1.000000e+00 : f32
    %23 = vector.broadcast %cst_17 : f32 to vector<32x512xf32>
    %24 = arith.addf %23, %22 : vector<32x512xf32>
    %25 = math.log %24 : vector<32x512xf32>
    %26 = arith.mulf %21, %25 : vector<32x512xf32>
    %c0_18 = arith.constant 0 : index
    %c0_19 = arith.constant 0 : index
    %27 = vector.load %arg7[%c0_18, %c0_19] : memref<8x32xf32, #tpu.memory_space<vmem>>, vector<8x32xf32>
    %cst_20 = arith.constant dense<0.000000e+00> : vector<8x512xf32>
    %28 = tpu.matmul %27, %26, %cst_20 {dimension_numbers = #tpu.dot_dimension_numbers<[1], [0], [0], [1], [0, 0, 1, 1], [], []>} : vector<8x32xf32>, vector<32x512xf32>, vector<8x512xf32> -> vector<8x512xf32>
    %c0_21 = arith.constant 0 : index
    %c0_22 = arith.constant 0 : index
    %29 = vector.load %arg8[%c0_21, %c0_22] : memref<8x1xf32, #tpu.memory_space<vmem>>, vector<8x1xf32>
    %30 = vector.broadcast %29 : vector<8x1xf32> to vector<8x512xf32>
    %31 = arith.addf %28, %30 : vector<8x512xf32>
    %cst_23 = arith.constant 0.000000e+00 : f32
    %32 = vector.broadcast %cst_23 : f32 to vector<8x512xf32>
    %33 = arith.maximumf %31, %32 : vector<8x512xf32>
    %c0_24 = arith.constant 0 : index
    %c0_25 = arith.constant 0 : index
    %c0_26 = arith.constant 0 : index
    %34 = vector.load %arg9[%c0_24, %c0_25, %c0_26] : memref<1x8x512xf32, #tpu.memory_space<vmem>>, vector<1x8x512xf32>
    %35 = vector.shape_cast %34 : vector<1x8x512xf32> to vector<8x512xf32>
    %36 = vector.shape_cast %33 : vector<8x512xf32> to vector<1x8x512xf32>
    tpu.vector_store %arg9[%c0_24, %c0_25, %c0_26], %36 {strides = array<i32>} : memref<1x8x512xf32, #tpu.memory_space<vmem>>, vector<1x8x512xf32>,
    return
  }
  func.func @transform_0(%arg0: i32) -> (i32, i32, i32) {
    %c0_i32 = arith.constant 0 : i32
    %c0_i32_0 = arith.constant 0 : i32
    %c0_i32_1 = arith.constant 0 : i32
    return %arg0, %c0_i32, %c0_i32_0 : i32, i32, i32
  }
  func.func @transform_1(%arg0: i32) -> (i32, i32) {
    %c0_i32 = arith.constant 0 : i32
    %c0_i32_0 = arith.constant 0 : i32
    %c0_i32_1 = arith.constant 0 : i32
    return %c0_i32, %c0_i32_0 : i32, i32
  }
  func.func @transform_2(%arg0: i32) -> (i32, i32) {
    %c0_i32 = arith.constant 0 : i32
    %c0_i32_0 = arith.constant 0 : i32
    %c0_i32_1 = arith.constant 0 : i32
    return %c0_i32, %c0_i32_0 : i32, i32
  }
  func.func @transform_3(%arg0: i32) -> (i32, i32) {
    %c0_i32 = arith.constant 0 : i32
    %c0_i32_0 = arith.constant 0 : i32
    %c0_i32_1 = arith.constant 0 : i32
    return %c0_i32, %c0_i32_0 : i32, i32
  }
  func.func @transform_4(%arg0: i32) -> (i32, i32) {
    %c0_i32 = arith.constant 0 : i32
    %c0_i32_0 = arith.constant 0 : i32
    %c0_i32_1 = arith.constant 0 : i32
    return %c0_i32, %c0_i32_0 : i32, i32
  }
  func.func @transform_5(%arg0: i32) -> (i32, i32) {
    %c0_i32 = arith.constant 0 : i32
    %c0_i32_0 = arith.constant 0 : i32
    %c0_i32_1 = arith.constant 0 : i32
    return %c0_i32, %c0_i32_0 : i32, i32
  }
  func.func @transform_6(%arg0: i32) -> (i32, i32) {
    %c0_i32 = arith.constant 0 : i32
    %c0_i32_0 = arith.constant 0 : i32
    %c0_i32_1 = arith.constant 0 : i32
    return %c0_i32, %c0_i32_0 : i32, i32
  }
  func.func @transform_7(%arg0: i32) -> (i32, i32) {
    %c0_i32 = arith.constant 0 : i32
    %c0_i32_0 = arith.constant 0 : i32
    %c0_i32_1 = arith.constant 0 : i32
    return %c0_i32, %c0_i32_0 : i32, i32
  }
  func.func @transform_8(%arg0: i32) -> (i32, i32, i32) {
    %c0_i32 = arith.constant 0 : i32
    %c0_i32_0 = arith.constant 0 : i32
    %c0_i32_1 = arith.constant 0 : i32
    return %arg0, %c0_i32, %c0_i32_0 : i32, i32, i32
  }
}

</mosaic_0001>

<llo_original>
// kernel: _lambda_.1
$region0: #{_lambda_.1}
  #allocation0 [shape = 'u32[]', space=smem, size = 0x4, offset = 0x4, fixed_abs, tag = 'smem constant byte address 0x4 - core index']
  #allocation1 [shape = 'u32[144,128]{1,0:T(1,128)}', space=vmem, size = 0x12000, scoped, tag = 'internal scratch']
  %s0 = inlined_call_operand.vmem [shape: f32[2,128,512], index: 0, kind: input, shape index: {}]
  %s1 = inlined_call_operand.vmem [shape: f32[128,128], index: 1, kind: input, shape index: {}]
  %s2 = inlined_call_operand.vmem [shape: f32[128,128], index: 2, kind: input, shape index: {}]
  %s3 = inlined_call_operand.vmem [shape: f32[128,1], index: 3, kind: input, shape index: {}]
  %s4 = inlined_call_operand.vmem [shape: f32[32,128], index: 4, kind: input, shape index: {}]
  %s5 = inlined_call_operand.vmem [shape: f32[32,1], index: 5, kind: input, shape index: {}]
  %s6 = inlined_call_operand.vmem [shape: f32[8,32], index: 6, kind: input, shape index: {}]
  %s7 = inlined_call_operand.vmem [shape: f32[8,1], index: 7, kind: input, shape index: {}]
  %s8 = inlined_call_operand.vmem [shape: f32[2,8,512], index: 8, kind: output, shape index: {}]
  %s9 = sld [smem:[#allocation0]]
  $region65: #{_lambda_.1} parent=0
    _
  %s11 = ssub.s32 1, %s9
  %s12 = scalar_select 0, %s11, %s9
  loop: start=0, step=1, limit=4
  $region2: #{_lambda_.1} parent=0 // loop_pre_header
    _
  $region3: #{_lambda_.1} parent=0 // loop_header
    %s14 = sphi 0, %s18
    %p15 = scmp.ge.s32.totalorder %s14, 4
    %s24 = sphi 0, %s26
    %s27 = sphi 0, %s24
    %s28 = sphi 0, %s27
    %s44 = sphi 0, %s28
    %s48 = sphi 0, %s48
    %s50 = sphi 0, %s48
    %s51 = sphi 0, %s50
    %s65 = sphi 0, %s51
    %s69 = sphi 0, %s69
    %s71 = sphi 0, %s69
    %s72 = sphi 0, %s71
    %s86 = sphi 0, %s72
    %s90 = sphi 0, %s90
    %s92 = sphi 0, %s90
    %s93 = sphi 0, %s92
    %s107 = sphi 0, %s93
    %s111 = sphi 0, %s111
    %s113 = sphi 0, %s111
    %s114 = sphi 0, %s113
    %s128 = sphi 0, %s114
    %s132 = sphi 0, %s132
    %s134 = sphi 0, %s132
    %s135 = sphi 0, %s134
    %s149 = sphi 0, %s135
    %s153 = sphi 0, %s153
    %s155 = sphi 0, %s153
    %s156 = sphi 0, %s155
    %s170 = sphi 0, %s156
    %s174 = sphi 0, %s174
    %s176 = sphi 0, %s174
    %s177 = sphi 0, %s176
    %s191 = sphi 0, %s177
    %s197 = sphi 0, %s199
    %s200 = sphi 0, %s197
    %s201 = sphi 0, %s200
    %s217 = sphi 0, %s201
  $region4: #{_lambda_.1} parent=0 // loop_header_branch
    %17 = sbr.rel (%p15) target = $region8
  $region5: #{_lambda_.1} parent=0 // loop_body
    %s19 = ssub.s32 %s14, 1
    %s20 = ssub.s32 %s14, 2
    %s21 = sadd.s32 %s14, 1
    %s22 = ssub.s32 %s14, %s21
    %p23 = scmp.eq.s32.totalorder %s22, 0
    %s25 = sadd.s32 %s24, 1
    %s26 = scalar_select %p23, %s24, %s25
    %p29 = pneg %p23
    %p30 = scmp.eq.s32.totalorder %s14, 1
    %p31 = por %p29, %p30
    %p32 = scmp.ne.s32.totalorder %s24, %s27
    %p33 = scmp.eq.s32.totalorder %s14, 0
    %p34 = por %p32, %p33
    %p35 = scmp.ne.s32.totalorder %s24, %s27
    %p36 = scmp.eq.s32.totalorder %s19, 1
    %p37 = por %p35, %p36
    %p38 = scmp.ne.s32.totalorder %s27, %s28
    %p39 = scmp.eq.s32.totalorder %s19, 0
    %p40 = por %p38, %p39
    %p41 = scmp.ne.s32.totalorder %s27, %s28
    %p42 = scmp.eq.s32.totalorder %s20, 1
    %p43 = por %p41, %p42
    %p45 = scmp.ne.s32.totalorder %s28, %s44
    %p46 = scmp.eq.s32.totalorder %s20, 0
    %p47 = por %p45, %p46
    %s49 = sadd.s32 %s48, 1
    %p52 = scmp.eq.s32.totalorder %s14, 1
    %p53 = scmp.ne.s32.totalorder %s48, %s50
    %p54 = scmp.eq.s32.totalorder %s14, 0
    %p55 = por %p53, %p54
    %p56 = scmp.ne.s32.totalorder %s48, %s50
    %p57 = scmp.eq.s32.totalorder %s19, 1
    %p58 = por %p56, %p57
    %p59 = scmp.ne.s32.totalorder %s50, %s51
    %p60 = scmp.eq.s32.totalorder %s19, 0
    %p61 = por %p59, %p60
    %p62 = scmp.ne.s32.totalorder %s50, %s51
    %p63 = scmp.eq.s32.totalorder %s20, 1
    %p64 = por %p62, %p63
    %p66 = scmp.ne.s32.totalorder %s51, %s65
    %p67 = scmp.eq.s32.totalorder %s20, 0
    %p68 = por %p66, %p67
    %s70 = sadd.s32 %s69, 1
    %p73 = scmp.eq.s32.totalorder %s14, 1
    %p74 = scmp.ne.s32.totalorder %s69, %s71
    %p75 = scmp.eq.s32.totalorder %s14, 0
    %p76 = por %p74, %p75
    %p77 = scmp.ne.s32.totalorder %s69, %s71
    %p78 = scmp.eq.s32.totalorder %s19, 1
    %p79 = por %p77, %p78
    %p80 = scmp.ne.s32.totalorder %s71, %s72
    %p81 = scmp.eq.s32.totalorder %s19, 0
    %p82 = por %p80, %p81
    %p83 = scmp.ne.s32.totalorder %s71, %s72
    %p84 = scmp.eq.s32.totalorder %s20, 1
    %p85 = por %p83, %p84
    %p87 = scmp.ne.s32.totalorder %s72, %s86
    %p88 = scmp.eq.s32.totalorder %s20, 0
    %p89 = por %p87, %p88
    %s91 = sadd.s32 %s90, 1
    %p94 = scmp.eq.s32.totalorder %s14, 1
    %p95 = scmp.ne.s32.totalorder %s90, %s92
    %p96 = scmp.eq.s32.totalorder %s14, 0
    %p97 = por %p95, %p96
    %p98 = scmp.ne.s32.totalorder %s90, %s92
    %p99 = scmp.eq.s32.totalorder %s19, 1
    %p100 = por %p98, %p99
    %p101 = scmp.ne.s32.totalorder %s92, %s93
    %p102 = scmp.eq.s32.totalorder %s19, 0
    %p103 = por %p101, %p102
    %p104 = scmp.ne.s32.totalorder %s92, %s93
    %p105 = scmp.eq.s32.totalorder %s20, 1
    %p106 = por %p104, %p105
    %p108 = scmp.ne.s32.totalorder %s93, %s107
    %p109 = scmp.eq.s32.totalorder %s20, 0
    %p110 = por %p108, %p109
    %s112 = sadd.s32 %s111, 1
    %p115 = scmp.eq.s32.totalorder %s14, 1
    %p116 = scmp.ne.s32.totalorder %s111, %s113
    %p117 = scmp.eq.s32.totalorder %s14, 0
    %p118 = por %p116, %p117
    %p119 = scmp.ne.s32.totalorder %s111, %s113
    %p120 = scmp.eq.s32.totalorder %s19, 1
    %p121 = por %p119, %p120
    %p122 = scmp.ne.s32.totalorder %s113, %s114
    %p123 = scmp.eq.s32.totalorder %s19, 0
    %p124 = por %p122, %p123
    %p125 = scmp.ne.s32.totalorder %s113, %s114
    %p126 = scmp.eq.s32.totalorder %s20, 1
    %p127 = por %p125, %p126
    %p129 = scmp.ne.s32.totalorder %s114, %s128
    %p130 = scmp.eq.s32.totalorder %s20, 0
    %p131 = por %p129, %p130
    %s133 = sadd.s32 %s132, 1
    %p136 = scmp.eq.s32.totalorder %s14, 1
    %p137 = scmp.ne.s32.totalorder %s132, %s134
    %p138 = scmp.eq.s32.totalorder %s14, 0
    %p139 = por %p137, %p138
    %p140 = scmp.ne.s32.totalorder %s132, %s134
    %p141 = scmp.eq.s32.totalorder %s19, 1
    %p142 = por %p140, %p141
    %p143 = scmp.ne.s32.totalorder %s134, %s135
    %p144 = scmp.eq.s32.totalorder %s19, 0
    %p145 = por %p143, %p144
    %p146 = scmp.ne.s32.totalorder %s134, %s135
    %p147 = scmp.eq.s32.totalorder %s20, 1
    %p148 = por %p146, %p147
    %p150 = scmp.ne.s32.totalorder %s135, %s149
    %p151 = scmp.eq.s32.totalorder %s20, 0
    %p152 = por %p150, %p151
    %s154 = sadd.s32 %s153, 1
    %p157 = scmp.eq.s32.totalorder %s14, 1
    %p158 = scmp.ne.s32.totalorder %s153, %s155
    %p159 = scmp.eq.s32.totalorder %s14, 0
    %p160 = por %p158, %p159
    %p161 = scmp.ne.s32.totalorder %s153, %s155
    %p162 = scmp.eq.s32.totalorder %s19, 1
    %p163 = por %p161, %p162
    %p164 = scmp.ne.s32.totalorder %s155, %s156
    %p165 = scmp.eq.s32.totalorder %s19, 0
    %p166 = por %p164, %p165
    %p167 = scmp.ne.s32.totalorder %s155, %s156
    %p168 = scmp.eq.s32.totalorder %s20, 1
    %p169 = por %p167, %p168
    %p171 = scmp.ne.s32.totalorder %s156, %s170
    %p172 = scmp.eq.s32.totalorder %s20, 0
    %p173 = por %p171, %p172
    %s175 = sadd.s32 %s174, 1
    %p178 = scmp.eq.s32.totalorder %s14, 1
    %p179 = scmp.ne.s32.totalorder %s174, %s176
    %p180 = scmp.eq.s32.totalorder %s14, 0
    %p181 = por %p179, %p180
    %p182 = scmp.ne.s32.totalorder %s174, %s176
    %p183 = scmp.eq.s32.totalorder %s19, 1
    %p184 = por %p182, %p183
    %p185 = scmp.ne.s32.totalorder %s176, %s177
    %p186 = scmp.eq.s32.totalorder %s19, 0
    %p187 = por %p185, %p186
    %p188 = scmp.ne.s32.totalorder %s176, %s177
    %p189 = scmp.eq.s32.totalorder %s20, 1
    %p190 = por %p188, %p189
    %p192 = scmp.ne.s32.totalorder %s177, %s191
    %p193 = scmp.eq.s32.totalorder %s20, 0
    %p194 = por %p192, %p193
    %s195 = ssub.s32 %s14, %s21
    %p196 = scmp.eq.s32.totalorder %s195, 0
    %s198 = sadd.s32 %s197, 1
    %s199 = scalar_select %p196, %s197, %s198
    %p202 = pneg %p196
    %p203 = scmp.eq.s32.totalorder %s14, 1
    %p204 = por %p202, %p203
    %p205 = scmp.ne.s32.totalorder %s197, %s200
    %p206 = scmp.eq.s32.totalorder %s14, 0
    %p207 = por %p205, %p206
    %p208 = scmp.ne.s32.totalorder %s197, %s200
    %p209 = scmp.eq.s32.totalorder %s19, 1
    %p210 = por %p208, %p209
    %p211 = scmp.ne.s32.totalorder %s200, %s201
    %p212 = scmp.eq.s32.totalorder %s19, 0
    %p213 = por %p211, %p212
    %p214 = scmp.ne.s32.totalorder %s200, %s201
    %p215 = scmp.eq.s32.totalorder %s20, 1
    %p216 = por %p214, %p215
    %p218 = scmp.ne.s32.totalorder %s201, %s217
    %p219 = scmp.eq.s32.totalorder %s20, 0
    %p220 = por %p218, %p219
    %p221 = scmp.le.s32.totalorder 1, %s14
    %p222 = scmp.lt.s32.totalorder %s14, 3
    %p223 = pnand %p221, %p222
    %p224 = pneg %p223
    // Predicated region
    $region9: #{_lambda_.1} parent=5 // pred_check
      _
    $region10: #{_lambda_.1} parent=5 // pred_check_branch
      %226 = sbr.rel (%p223) target = $region12
    $region11: #{_lambda_.1} parent=5 // pred_region
      %s227 = ssub.s32 %s14, 1
      // Predicated region
      $region13: #{_lambda_.1} parent=11 // pred_check
        %p228 = pneg %p61
      $region14: #{_lambda_.1} parent=11 // pred_check_branch
        %230 = sbr.rel (%p228) target = $region16
      $region15: #{_lambda_.1} parent=11 // pred_region
        _
      $region16: #{_lambda_.1} parent=11 // pred_fallthru
        _
      // Predicated region
      $region17: #{_lambda_.1} parent=11 // pred_check
        %p231 = pneg %p82
      $region18: #{_lambda_.1} parent=11 // pred_check_branch
        %233 = sbr.rel (%p231) target = $region20
      $region19: #{_lambda_.1} parent=11 // pred_region
        _
      $region20: #{_lambda_.1} parent=11 // pred_fallthru
        _
      // Predicated region
      $region21: #{_lambda_.1} parent=11 // pred_check
        %p234 = pneg %p103
      $region22: #{_lambda_.1} parent=11 // pred_check_branch
        %236 = sbr.rel (%p234) target = $region24
      $region23: #{_lambda_.1} parent=11 // pred_region
        _
      $region24: #{_lambda_.1} parent=11 // pred_fallthru
        _
      // Predicated region
      $region25: #{_lambda_.1} parent=11 // pred_check
        %p237 = pneg %p124
      $region26: #{_lambda_.1} parent=11 // pred_check_branch
        %239 = sbr.rel (%p237) target = $region28
      $region27: #{_lambda_.1} parent=11 // pred_region
        _
      $region28: #{_lambda_.1} parent=11 // pred_fallthru
        _
      // Predicated region
      $region29: #{_lambda_.1} parent=11 // pred_check
        %p240 = pneg %p145
      $region30: #{_lambda_.1} parent=11 // pred_check_branch
        %242 = sbr.rel (%p240) target = $region32
      $region31: #{_lambda_.1} parent=11 // pred_region
        _
      $region32: #{_lambda_.1} parent=11 // pred_fallthru
        _
      // Predicated region
      $region33: #{_lambda_.1} parent=11 // pred_check
        %p243 = pneg %p166
      $region34: #{_lambda_.1} parent=11 // pred_check_branch
        %245 = sbr.rel (%p243) target = $region36
      $region35: #{_lambda_.1} parent=11 // pred_region
        _
      $region36: #{_lambda_.1} parent=11 // pred_fallthru
        _
      // Predicated region
      $region37: #{_lambda_.1} parent=11 // pred_check
        %p246 = pneg %p187
      $region38: #{_lambda_.1} parent=11 // pred_check_branch
        %248 = sbr.rel (%p246) target = $region40
      $region39: #{_lambda_.1} parent=11 // pred_region
        _
      $region40: #{_lambda_.1} parent=11 // pred_fallthru
        _
    $region12: #{_lambda_.1} parent=5 // pred_fallthru
      _
    %p249 = scmp.lt.s32.totalorder %s14, 2
    // Predicated region
    $region41: #{_lambda_.1} parent=5 // pred_check
      %p250 = pneg %p249
    $region42: #{_lambda_.1} parent=5 // pred_check_branch
      %252 = sbr.rel (%p250) target = $region44
    $region43: #{_lambda_.1} parent=5 // pred_region
      // Predicated region
      $region45: #{_lambda_.1} parent=43 // pred_check
        %p253 = pneg %p34
      $region46: #{_lambda_.1} parent=43 // pred_check_branch
        %255 = sbr.rel (%p253) target = $region48
      $region47: #{_lambda_.1} parent=43 // pred_region
        %p256 = scmp.lt.s32.totalorder %s14, 1
        %s257 = scalar_select %p256, %s14, 1
        %s258 = smul.addr %s257, 64
        %s259 = smul.addr %s258, 8
        %s260 = scalar_lea.vmem %s0, %s259
      $region48: #{_lambda_.1} parent=43 // pred_fallthru
        _
    $region44: #{_lambda_.1} parent=5 // pred_fallthru
      _
    %p261 = scmp.le.s32.totalorder 1, %s14
    %p262 = scmp.lt.s32.totalorder %s14, 3
    %p263 = pnand %p261, %p262
    %p264 = pneg %p263
    // Predicated region
    $region49: #{_lambda_.1} parent=5 // pred_check
      _
    $region50: #{_lambda_.1} parent=5 // pred_check_branch
      %266 = sbr.rel (%p263) target = $region52
    $region51: #{_lambda_.1} parent=5 // pred_region
      %s267 = ssub.s32 %s14, 1
      %p268 = scmp.lt.s32.totalorder %s19, 1
      %s269 = scalar_select %p268, %s19, 1
      %s270 = smul.addr %s269, 64
      %s271 = smul.addr %s270, 8
      %s272 = scalar_lea.vmem %s0, %s271
      %p273 = pneg %p40
      %p274 = pneg %p37
      %p275 = pneg %p61
      %p276 = pneg %p58
      %p277 = pneg %p82
      %p278 = pneg %p79
      %p279 = pneg %p103
      %p280 = pneg %p100
      %p281 = pneg %p124
      %p282 = pneg %p121
      %p283 = pneg %p145
      %p284 = pneg %p142
      %p285 = pneg %p166
      %p286 = pneg %p163
      %p287 = pneg %p187
      %p288 = pneg %p184
      %p289 = pneg %p213
      %p290 = pneg %p210
      %p291 = scmp.lt.s32.totalorder %s19, 1
      %s292 = scalar_select %p291, %s19, 1
      %s293 = smul.addr %s292, 4
      %s294 = smul.addr %s293, 8
      %s295 = scalar_lea.vmem %s8, %s294
      %p296 = scmp.lt.s32.totalorder %s19, 1
      %s297 = scalar_select %p296, %s19, 1
      %s298 = smul.addr %s297, 64
      %s299 = smul.addr %s298, 8
      %s300 = scalar_lea.vmem %s0, %s299
      %p301 = scmp.lt.s32.totalorder %s19, 1
      %s302 = scalar_select %p301, %s19, 1
      %s303 = smul.addr %s302, 4
      %s304 = smul.addr %s303, 8
      %s305 = scalar_lea.vmem %s8, %s304
      %v306 = vld [vmem:[%s300] sm:$0xff]
      %v307 = vld [vmem:[%s300 + $0x8] sm:$0xff]
      %v308 = vld [vmem:[%s300 + $0x10] sm:$0xff]
      %v309 = vld [vmem:[%s300 + $0x18] sm:$0xff]
      %v310 = vld [vmem:[%s300 + $0x20] sm:$0xff]
      %v311 = vld [vmem:[%s300 + $0x28] sm:$0xff]
      %v312 = vld [vmem:[%s300 + $0x30] sm:$0xff]
      %v313 = vld [vmem:[%s300 + $0x38] sm:$0xff]
      %v314 = vld [vmem:[%s300 + $0x40] sm:$0xff]
      %v315 = vld [vmem:[%s300 + $0x48] sm:$0xff]
      %v316 = vld [vmem:[%s300 + $0x50] sm:$0xff]
      %v317 = vld [vmem:[%s300 + $0x58] sm:$0xff]
      %v318 = vld [vmem:[%s300 + $0x60] sm:$0xff]
      %v319 = vld [vmem:[%s300 + $0x68] sm:$0xff]
      %v320 = vld [vmem:[%s300 + $0x70] sm:$0xff]
      %v321 = vld [vmem:[%s300 + $0x78] sm:$0xff]
      %v322 = vld [vmem:[%s300 + $0x80] sm:$0xff]
      %v323 = vld [vmem:[%s300 + $0x88] sm:$0xff]
      %v324 = vld [vmem:[%s300 + $0x90] sm:$0xff]
      %v325 = vld [vmem:[%s300 + $0x98] sm:$0xff]
      %v326 = vld [vmem:[%s300 + $0xa0] sm:$0xff]
      %v327 = vld [vmem:[%s300 + $0xa8] sm:$0xff]
      %v328 = vld [vmem:[%s300 + $0xb0] sm:$0xff]
      %v329 = vld [vmem:[%s300 + $0xb8] sm:$0xff]
      %v330 = vld [vmem:[%s300 + $0xc0] sm:$0xff]
      %v331 = vld [vmem:[%s300 + $0xc8] sm:$0xff]
      %v332 = vld [vmem:[%s300 + $0xd0] sm:$0xff]
      %v333 = vld [vmem:[%s300 + $0xd8] sm:$0xff]
      %v334 = vld [vmem:[%s300 + $0xe0] sm:$0xff]
      %v335 = vld [vmem:[%s300 + $0xe8] sm:$0xff]
      %v336 = vld [vmem:[%s300 + $0xf0] sm:$0xff]
      %v337 = vld [vmem:[%s300 + $0xf8] sm:$0xff]
      %v338 = vld [vmem:[%s300 + $0x100] sm:$0xff]
      %v339 = vld [vmem:[%s300 + $0x108] sm:$0xff]
      %v340 = vld [vmem:[%s300 + $0x110] sm:$0xff]
      %v341 = vld [vmem:[%s300 + $0x118] sm:$0xff]
      %v342 = vld [vmem:[%s300 + $0x120] sm:$0xff]
      %v343 = vld [vmem:[%s300 + $0x128] sm:$0xff]
      %v344 = vld [vmem:[%s300 + $0x130] sm:$0xff]
      %v345 = vld [vmem:[%s300 + $0x138] sm:$0xff]
      %v346 = vld [vmem:[%s300 + $0x140] sm:$0xff]
      %v347 = vld [vmem:[%s300 + $0x148] sm:$0xff]
      %v348 = vld [vmem:[%s300 + $0x150] sm:$0xff]
      %v349 = vld [vmem:[%s300 + $0x158] sm:$0xff]
      %v350 = vld [vmem:[%s300 + $0x160] sm:$0xff]
      %v351 = vld [vmem:[%s300 + $0x168] sm:$0xff]
      %v352 = vld [vmem:[%s300 + $0x170] sm:$0xff]
      %v353 = vld [vmem:[%s300 + $0x178] sm:$0xff]
      %v354 = vld [vmem:[%s300 + $0x180] sm:$0xff]
      %v355 = vld [vmem:[%s300 + $0x188] sm:$0xff]
      %v356 = vld [vmem:[%s300 + $0x190] sm:$0xff]
      %v357 = vld [vmem:[%s300 + $0x198] sm:$0xff]
      %v358 = vld [vmem:[%s300 + $0x1a0] sm:$0xff]
      %v359 = vld [vmem:[%s300 + $0x1a8] sm:$0xff]
      %v360 = vld [vmem:[%s300 + $0x1b0] sm:$0xff]
      %v361 = vld [vmem:[%s300 + $0x1b8] sm:$0xff]
      %v362 = vld [vmem:[%s300 + $0x1c0] sm:$0xff]
      %v363 = vld [vmem:[%s300 + $0x1c8] sm:$0xff]
      %v364 = vld [vmem:[%s300 + $0x1d0] sm:$0xff]
      %v365 = vld [vmem:[%s300 + $0x1d8] sm:$0xff]
      %v366 = vld [vmem:[%s300 + $0x1e0] sm:$0xff]
      %v367 = vld [vmem:[%s300 + $0x1e8] sm:$0xff]
      %v368 = vld [vmem:[%s300 + $0x1f0] sm:$0xff]
      %v369 = vld [vmem:[%s300 + $0x1f8] sm:$0xff]
      %v370 = vld [vmem:[%s1] sm:$0xff]
      %v371 = vld [vmem:[%s1 + $0x8] sm:$0xff]
      %v372 = vld [vmem:[%s1 + $0x10] sm:$0xff]
      %v373 = vld [vmem:[%s1 + $0x18] sm:$0xff]
      %v374 = vld [vmem:[%s1 + $0x20] sm:$0xff]
      %v375 = vld [vmem:[%s1 + $0x28] sm:$0xff]
      %v376 = vld [vmem:[%s1 + $0x30] sm:$0xff]
      %v377 = vld [vmem:[%s1 + $0x38] sm:$0xff]
      %v378 = vld [vmem:[%s1 + $0x40] sm:$0xff]
      %v379 = vld [vmem:[%s1 + $0x48] sm:$0xff]
      %v380 = vld [vmem:[%s1 + $0x50] sm:$0xff]
      %v381 = vld [vmem:[%s1 + $0x58] sm:$0xff]
      %v382 = vld [vmem:[%s1 + $0x60] sm:$0xff]
      %v383 = vld [vmem:[%s1 + $0x68] sm:$0xff]
      %v384 = vld [vmem:[%s1 + $0x70] sm:$0xff]
      %v385 = vld [vmem:[%s1 + $0x78] sm:$0xff]
      %v386 = vld [vmem:[%s3] sm:$0xff]
      %v387 = vld [vmem:[%s3 + $0x8] sm:$0xff]
      %v388 = vld [vmem:[%s3 + $0x10] sm:$0xff]
      %v389 = vld [vmem:[%s3 + $0x18] sm:$0xff]
      %v390 = vld [vmem:[%s3 + $0x20] sm:$0xff]
      %v391 = vld [vmem:[%s3 + $0x28] sm:$0xff]
      %v392 = vld [vmem:[%s3 + $0x30] sm:$0xff]
      %v393 = vld [vmem:[%s3 + $0x38] sm:$0xff]
      %v394 = vld [vmem:[%s3 + $0x40] sm:$0xff]
      %v395 = vld [vmem:[%s3 + $0x48] sm:$0xff]
      %v396 = vld [vmem:[%s3 + $0x50] sm:$0xff]
      %v397 = vld [vmem:[%s3 + $0x58] sm:$0xff]
      %v398 = vld [vmem:[%s3 + $0x60] sm:$0xff]
      %v399 = vld [vmem:[%s3 + $0x68] sm:$0xff]
      %v400 = vld [vmem:[%s3 + $0x70] sm:$0xff]
      %v401 = vld [vmem:[%s3 + $0x78] sm:$0xff]
      %403 = vset.pattern.permute.xlu0 0
      %404 = vperm.xlu0 %403, %v386
      %v405 = vpop.permute.xlu0 %404
      %408 = vset.pattern.permute.xlu0 0
      %409 = vperm.xlu0 %408, %v387
      %v410 = vpop.permute.xlu0 %409
      %413 = vset.pattern.permute.xlu0 0
      %414 = vperm.xlu0 %413, %v388
      %v415 = vpop.permute.xlu0 %414
      %418 = vset.pattern.permute.xlu0 0
      %419 = vperm.xlu0 %418, %v389
      %v420 = vpop.permute.xlu0 %419
      %423 = vset.pattern.permute.xlu0 0
      %424 = vperm.xlu0 %423, %v390
      %v425 = vpop.permute.xlu0 %424
      %428 = vset.pattern.permute.xlu0 0
      %429 = vperm.xlu0 %428, %v391
      %v430 = vpop.permute.xlu0 %429
      %433 = vset.pattern.permute.xlu0 0
      %434 = vperm.xlu0 %433, %v392
      %v435 = vpop.permute.xlu0 %434
      %438 = vset.pattern.permute.xlu0 0
      %439 = vperm.xlu0 %438, %v393
      %v440 = vpop.permute.xlu0 %439
      %443 = vset.pattern.permute.xlu0 0
      %444 = vperm.xlu0 %443, %v394
      %v445 = vpop.permute.xlu0 %444
      %448 = vset.pattern.permute.xlu0 0
      %449 = vperm.xlu0 %448, %v395
      %v450 = vpop.permute.xlu0 %449
      %453 = vset.pattern.permute.xlu0 0
      %454 = vperm.xlu0 %453, %v396
      %v455 = vpop.permute.xlu0 %454
      %458 = vset.pattern.permute.xlu0 0
      %459 = vperm.xlu0 %458, %v397
      %v460 = vpop.permute.xlu0 %459
      %463 = vset.pattern.permute.xlu0 0
      %464 = vperm.xlu0 %463, %v398
      %v465 = vpop.permute.xlu0 %464
      %468 = vset.pattern.permute.xlu0 0
      %469 = vperm.xlu0 %468, %v399
      %v470 = vpop.permute.xlu0 %469
      %473 = vset.pattern.permute.xlu0 0
      %474 = vperm.xlu0 %473, %v400
      %v475 = vpop.permute.xlu0 %474
      %478 = vset.pattern.permute.xlu0 0
      %479 = vperm.xlu0 %478, %v401
      %v480 = vpop.permute.xlu0 %479
      %482 = vmatprep.subr.mxu0 %v367
      %483 = vmatpush1.msra.mxu0 %v366
      %484 = vmatprep.subr.mxu0 %v363
      %485 = vmatpush1.msra.mxu0 %v362
      %486 = vmatprep.subr.mxu0 %v359
      %487 = vmatpush1.msra.mxu0 %v358
      %488 = vmatprep.subr.mxu0 %v355
      %489 = vmatpush1.msra.mxu0 %v354
      %490 = vmatprep.subr.mxu0 %v351
      %491 = vmatpush1.msra.mxu0 %v350
      %492 = vmatprep.subr.mxu0 %v347
      %493 = vmatpush1.msra.mxu0 %v346
      %494 = vmatprep.subr.mxu0 %v343
      %495 = vmatpush1.msra.mxu0 %v342
      %496 = vmatprep.subr.mxu0 %v339
      %497 = vmatpush1.msra.mxu0 %v338
      %498 = vmatprep.subr.mxu0 %v335
      %499 = vmatpush1.msra.mxu0 %v334
      %500 = vmatprep.subr.mxu0 %v331
      %501 = vmatpush1.msra.mxu0 %v330
      %502 = vmatprep.subr.mxu0 %v327
      %503 = vmatpush1.msra.mxu0 %v326
      %504 = vmatprep.subr.mxu0 %v323
      %505 = vmatpush1.msra.mxu0 %v322
      %506 = vmatprep.subr.mxu0 %v319
      %507 = vmatpush1.msra.mxu0 %v318
      %508 = vmatprep.subr.mxu0 %v315
      %509 = vmatpush1.msra.mxu0 %v314
      %510 = vmatprep.subr.mxu0 %v311
      %511 = vmatpush1.msra.mxu0 %v310
      %512 = vmatprep.subr.mxu0 %v307
      %513 = vmatpush1.msra.mxu0 %v306
      %514 = vmatprep.subr.mxu0 0.0
      %515 = vmatpush2.msra.mxu0 0.0
      %516 = vmatprep.subr.mxu0 0.0
      %517 = vmatpush2.msra.mxu0 0.0
      %518 = vmatprep.subr.mxu0 0.0
      %519 = vmatpush2.msra.mxu0 0.0
      %520 = vmatprep.subr.mxu0 0.0
      %521 = vmatpush2.msra.mxu0 0.0
      %522 = vmatprep.subr.mxu0 0.0
      %523 = vmatpush2.msra.mxu0 0.0
      %524 = vmatprep.subr.mxu0 0.0
      %525 = vmatpush2.msra.mxu0 0.0
      %526 = vmatprep.subr.mxu0 0.0
      %527 = vmatpush2.msra.mxu0 0.0
      %528 = vmatprep.subr.mxu0 0.0
      %529 = vmatpush2.msra.mxu0 0.0
      %530 = vmatprep.subr.mxu0 0.0
      %531 = vmatpush2.msra.mxu0 0.0
      %532 = vmatprep.subr.mxu0 0.0
      %533 = vmatpush2.msra.mxu0 0.0
      %534 = vmatprep.subr.mxu0 0.0
      %535 = vmatpush2.msra.mxu0 0.0
      %536 = vmatprep.subr.mxu0 0.0
      %537 = vmatpush2.msra.mxu0 0.0
      %538 = vmatprep.subr.mxu0 0.0
      %539 = vmatpush2.msra.mxu0 0.0
      %540 = vmatprep.subr.mxu0 0.0
      %541 = vmatpush2.msra.mxu0 0.0
      %542 = vmatprep.subr.mxu0 0.0
      %543 = vmatpush2.msra.mxu0 0.0
      %544 = vmatprep.subr.mxu0 0.0
      %545 = vmatpush2.msra.mxu0 0.0
      %546 = vmatprep.mubr.f32.mxu0 0.0
      %547 = vmatmul.mubr.f32.gmra.mxu0 %v370
      %v548 = vpop.f32.mrf.mxu0
      %v549 = vadd.f32 %v405, %v548
      %v550 = vpop.f32.mrf.mxu0
      %v551 = vadd.f32 %v405, %v550
      %552 = vmatprep.mubr.f32.mxu0 0.0
      %553 = vmatmul.mubr.f32.gmra.mxu0 %v371
      %v554 = vpop.f32.mrf.mxu0
      %v555 = vadd.f32 %v410, %v554
      %v556 = vpop.f32.mrf.mxu0
      %v557 = vadd.f32 %v410, %v556
      %558 = vmatprep.mubr.f32.mxu0 0.0
      %559 = vmatmul.mubr.f32.gmra.mxu0 %v372
      %v560 = vpop.f32.mrf.mxu0
      %v561 = vadd.f32 %v415, %v560
      %v562 = vpop.f32.mrf.mxu0
      %v563 = vadd.f32 %v415, %v562
      %564 = vmatprep.mubr.f32.mxu0 0.0
      %565 = vmatmul.mubr.f32.gmra.mxu0 %v373
      %v566 = vpop.f32.mrf.mxu0
      %v567 = vadd.f32 %v420, %v566
      %v568 = vpop.f32.mrf.mxu0
      %v569 = vadd.f32 %v420, %v568
      %570 = vmatprep.mubr.f32.mxu0 0.0
      %571 = vmatmul.mubr.f32.gmra.mxu0 %v374
      %v572 = vpop.f32.mrf.mxu0
      %v573 = vadd.f32 %v425, %v572
      %v574 = vpop.f32.mrf.mxu0
      %v575 = vadd.f32 %v425, %v574
      %576 = vmatprep.mubr.f32.mxu0 0.0
      %577 = vmatmul.mubr.f32.gmra.mxu0 %v375
      %v578 = vpop.f32.mrf.mxu0
      %v579 = vadd.f32 %v430, %v578
      %v580 = vpop.f32.mrf.mxu0
      %v581 = vadd.f32 %v430, %v580
      %582 = vmatprep.mubr.f32.mxu0 0.0
      %583 = vmatmul.mubr.f32.gmra.mxu0 %v376
      %v584 = vpop.f32.mrf.mxu0
      %v585 = vadd.f32 %v435, %v584
      %v586 = vpop.f32.mrf.mxu0
      %v587 = vadd.f32 %v435, %v586
      %588 = vmatprep.mubr.f32.mxu0 0.0
      %589 = vmatmul.mubr.f32.gmra.mxu0 %v377
      %v590 = vpop.f32.mrf.mxu0
      %v591 = vadd.f32 %v440, %v590
      %v592 = vpop.f32.mrf.mxu0
      %v593 = vadd.f32 %v440, %v592
      %594 = vmatprep.mubr.f32.mxu0 0.0
      %595 = vmatmul.mubr.f32.gmra.mxu0 %v378
      %v596 = vpop.f32.mrf.mxu0
      %v597 = vadd.f32 %v445, %v596
      %v598 = vpop.f32.mrf.mxu0
      %v599 = vadd.f32 %v445, %v598
      %600 = vmatprep.mubr.f32.mxu0 0.0
      %601 = vmatmul.mubr.f32.gmra.mxu0 %v379
      %v602 = vpop.f32.mrf.mxu0
      %v603 = vadd.f32 %v450, %v602
      %v604 = vpop.f32.mrf.mxu0
      %v605 = vadd.f32 %v450, %v604
      %606 = vmatprep.mubr.f32.mxu0 0.0
      %607 = vmatmul.mubr.f32.gmra.mxu0 %v380
      %v608 = vpop.f32.mrf.mxu0
      %v609 = vadd.f32 %v455, %v608
      %v610 = vpop.f32.mrf.mxu0
      %v611 = vadd.f32 %v455, %v610
      %612 = vmatprep.mubr.f32.mxu0 0.0
      %613 = vmatmul.mubr.f32.gmra.mxu0 %v381
      %v614 = vpop.f32.mrf.mxu0
      %v615 = vadd.f32 %v460, %v614
      %v616 = vpop.f32.mrf.mxu0
      %v617 = vadd.f32 %v460, %v616
      %618 = vmatprep.mubr.f32.mxu0 0.0
      %619 = vmatmul.mubr.f32.gmra.mxu0 %v382
      %v620 = vpop.f32.mrf.mxu0
      %v621 = vadd.f32 %v465, %v620
      %v622 = vpop.f32.mrf.mxu0
      %v623 = vadd.f32 %v465, %v622
      %624 = vmatprep.mubr.f32.mxu0 0.0
      %625 = vmatmul.mubr.f32.gmra.mxu0 %v383
      %v626 = vpop.f32.mrf.mxu0
      %v627 = vadd.f32 %v470, %v626
      %v628 = vpop.f32.mrf.mxu0
      %v629 = vadd.f32 %v470, %v628
      %630 = vmatprep.mubr.f32.mxu0 0.0
      %631 = vmatmul.mubr.f32.gmra.mxu0 %v384
      %v632 = vpop.f32.mrf.mxu0
      %v633 = vadd.f32 %v475, %v632
      %v634 = vpop.f32.mrf.mxu0
      %v635 = vadd.f32 %v475, %v634
      %636 = vmatprep.mubr.f32.mxu0 0.0
      %637 = vmatmul.mubr.f32.gmra.mxu0 %v385
      %v638 = vpop.f32.mrf.mxu0
      %v639 = vadd.f32 %v480, %v638
      %v640 = vpop.f32.mrf.mxu0
      %v641 = vadd.f32 %v480, %v640
      %642 = vdwg.mxu0
      %643 = vmatprep.subr.mxu0 %v369
      %644 = vmatpush1.msra.mxu0 %v368
      %645 = vmatprep.subr.mxu0 %v365
      %646 = vmatpush1.msra.mxu0 %v364
      %647 = vmatprep.subr.mxu0 %v361
      %648 = vmatpush1.msra.mxu0 %v360
      %649 = vmatprep.subr.mxu0 %v357
      %650 = vmatpush1.msra.mxu0 %v356
      %651 = vmatprep.subr.mxu0 %v353
      %652 = vmatpush1.msra.mxu0 %v352
      %653 = vmatprep.subr.mxu0 %v349
      %654 = vmatpush1.msra.mxu0 %v348
      %655 = vmatprep.subr.mxu0 %v345
      %656 = vmatpush1.msra.mxu0 %v344
      %657 = vmatprep.subr.mxu0 %v341
      %658 = vmatpush1.msra.mxu0 %v340
      %659 = vmatprep.subr.mxu0 %v337
      %660 = vmatpush1.msra.mxu0 %v336
      %661 = vmatprep.subr.mxu0 %v333
      %662 = vmatpush1.msra.mxu0 %v332
      %663 = vmatprep.subr.mxu0 %v329
      %664 = vmatpush1.msra.mxu0 %v328
      %665 = vmatprep.subr.mxu0 %v325
      %666 = vmatpush1.msra.mxu0 %v324
      %667 = vmatprep.subr.mxu0 %v321
      %668 = vmatpush1.msra.mxu0 %v320
      %669 = vmatprep.subr.mxu0 %v317
      %670 = vmatpush1.msra.mxu0 %v316
      %671 = vmatprep.subr.mxu0 %v313
      %672 = vmatpush1.msra.mxu0 %v312
      %673 = vmatprep.subr.mxu0 %v309
      %674 = vmatpush1.msra.mxu0 %v308
      %675 = vmatprep.subr.mxu0 0.0
      %676 = vmatpush2.msra.mxu0 0.0
      %677 = vmatprep.subr.mxu0 0.0
      %678 = vmatpush2.msra.mxu0 0.0
      %679 = vmatprep.subr.mxu0 0.0
      %680 = vmatpush2.msra.mxu0 0.0
      %681 = vmatprep.subr.mxu0 0.0
      %682 = vmatpush2.msra.mxu0 0.0
      %683 = vmatprep.subr.mxu0 0.0
      %684 = vmatpush2.msra.mxu0 0.0
      %685 = vmatprep.subr.mxu0 0.0
      %686 = vmatpush2.msra.mxu0 0.0
      %687 = vmatprep.subr.mxu0 0.0
      %688 = vmatpush2.msra.mxu0 0.0
      %689 = vmatprep.subr.mxu0 0.0
      %690 = vmatpush2.msra.mxu0 0.0
      %691 = vmatprep.subr.mxu0 0.0
      %692 = vmatpush2.msra.mxu0 0.0
      %693 = vmatprep.subr.mxu0 0.0
      %694 = vmatpush2.msra.mxu0 0.0
      %695 = vmatprep.subr.mxu0 0.0
      %696 = vmatpush2.msra.mxu0 0.0
      %697 = vmatprep.subr.mxu0 0.0
      %698 = vmatpush2.msra.mxu0 0.0
      %699 = vmatprep.subr.mxu0 0.0
      %700 = vmatpush2.msra.mxu0 0.0
      %701 = vmatprep.subr.mxu0 0.0
      %702 = vmatpush2.msra.mxu0 0.0
      %703 = vmatprep.subr.mxu0 0.0
      %704 = vmatpush2.msra.mxu0 0.0
      %705 = vmatprep.subr.mxu0 0.0
      %706 = vmatpush2.msra.mxu0 0.0
      %707 = vmatprep.mubr.f32.mxu0 0.0
      %708 = vmatmul.mubr.f32.gmra.mxu0 %v370
      %v709 = vpop.f32.mrf.mxu0
      %v710 = vadd.f32 %v405, %v709
      %v711 = vpop.f32.mrf.mxu0
      %v712 = vadd.f32 %v405, %v711
      %713 = vmatprep.mubr.f32.mxu0 0.0
      %714 = vmatmul.mubr.f32.gmra.mxu0 %v371
      %v715 = vpop.f32.mrf.mxu0
      %v716 = vadd.f32 %v410, %v715
      %v717 = vpop.f32.mrf.mxu0
      %v718 = vadd.f32 %v410, %v717
      %719 = vmatprep.mubr.f32.mxu0 0.0
      %720 = vmatmul.mubr.f32.gmra.mxu0 %v372
      %v721 = vpop.f32.mrf.mxu0
      %v722 = vadd.f32 %v415, %v721
      %v723 = vpop.f32.mrf.mxu0
      %v724 = vadd.f32 %v415, %v723
      %725 = vmatprep.mubr.f32.mxu0 0.0
      %726 = vmatmul.mubr.f32.gmra.mxu0 %v373
      %v727 = vpop.f32.mrf.mxu0
      %v728 = vadd.f32 %v420, %v727
      %v729 = vpop.f32.mrf.mxu0
      %v730 = vadd.f32 %v420, %v729
      %731 = vmatprep.mubr.f32.mxu0 0.0
      %732 = vmatmul.mubr.f32.gmra.mxu0 %v374
      %v733 = vpop.f32.mrf.mxu0
      %v734 = vadd.f32 %v425, %v733
      %v735 = vpop.f32.mrf.mxu0
      %v736 = vadd.f32 %v425, %v735
      %737 = vmatprep.mubr.f32.mxu0 0.0
      %738 = vmatmul.mubr.f32.gmra.mxu0 %v375
      %v739 = vpop.f32.mrf.mxu0
      %v740 = vadd.f32 %v430, %v739
      %v741 = vpop.f32.mrf.mxu0
      %v742 = vadd.f32 %v430, %v741
      %743 = vmatprep.mubr.f32.mxu0 0.0
      %744 = vmatmul.mubr.f32.gmra.mxu0 %v376
      %v745 = vpop.f32.mrf.mxu0
      %v746 = vadd.f32 %v435, %v745
      %v747 = vpop.f32.mrf.mxu0
      %v748 = vadd.f32 %v435, %v747
      %749 = vmatprep.mubr.f32.mxu0 0.0
      %750 = vmatmul.mubr.f32.gmra.mxu0 %v377
      %v751 = vpop.f32.mrf.mxu0
      %v752 = vadd.f32 %v440, %v751
      %v753 = vpop.f32.mrf.mxu0
      %v754 = vadd.f32 %v440, %v753
      %755 = vmatprep.mubr.f32.mxu0 0.0
      %756 = vmatmul.mubr.f32.gmra.mxu0 %v378
      %v757 = vpop.f32.mrf.mxu0
      %v758 = vadd.f32 %v445, %v757
      %v759 = vpop.f32.mrf.mxu0
      %v760 = vadd.f32 %v445, %v759
      %761 = vmatprep.mubr.f32.mxu0 0.0
      %762 = vmatmul.mubr.f32.gmra.mxu0 %v379
      %v763 = vpop.f32.mrf.mxu0
      %v764 = vadd.f32 %v450, %v763
      %v765 = vpop.f32.mrf.mxu0
      %v766 = vadd.f32 %v450, %v765
      %767 = vmatprep.mubr.f32.mxu0 0.0
      %768 = vmatmul.mubr.f32.gmra.mxu0 %v380
      %v769 = vpop.f32.mrf.mxu0
      %v770 = vadd.f32 %v455, %v769
      %v771 = vpop.f32.mrf.mxu0
      %v772 = vadd.f32 %v455, %v771
      %773 = vmatprep.mubr.f32.mxu0 0.0
      %774 = vmatmul.mubr.f32.gmra.mxu0 %v381
      %v775 = vpop.f32.mrf.mxu0
      %v776 = vadd.f32 %v460, %v775
      %v777 = vpop.f32.mrf.mxu0
      %v778 = vadd.f32 %v460, %v777
      %779 = vmatprep.mubr.f32.mxu0 0.0
      %780 = vmatmul.mubr.f32.gmra.mxu0 %v382
      %v781 = vpop.f32.mrf.mxu0
      %v782 = vadd.f32 %v465, %v781
      %v783 = vpop.f32.mrf.mxu0
      %v784 = vadd.f32 %v465, %v783
      %785 = vmatprep.mubr.f32.mxu0 0.0
      %786 = vmatmul.mubr.f32.gmra.mxu0 %v383
      %v787 = vpop.f32.mrf.mxu0
      %v788 = vadd.f32 %v470, %v787
      %v789 = vpop.f32.mrf.mxu0
      %v790 = vadd.f32 %v470, %v789
      %791 = vmatprep.mubr.f32.mxu0 0.0
      %792 = vmatmul.mubr.f32.gmra.mxu0 %v384
      %v793 = vpop.f32.mrf.mxu0
      %v794 = vadd.f32 %v475, %v793
      %v795 = vpop.f32.mrf.mxu0
      %v796 = vadd.f32 %v475, %v795
      %797 = vmatprep.mubr.f32.mxu0 0.0
      %798 = vmatmul.mubr.f32.gmra.mxu0 %v385
      %v799 = vpop.f32.mrf.mxu0
      %v800 = vadd.f32 %v480, %v799
      %v801 = vpop.f32.mrf.mxu0
      %v802 = vadd.f32 %v480, %v801
      %803 = vdwg.mxu0
      %v804 = vld [vmem:[%s2] sm:$0xff]
      %v805 = vld [vmem:[%s2 + $0x8] sm:$0xff]
      %v806 = vld [vmem:[%s2 + $0x10] sm:$0xff]
      %v807 = vld [vmem:[%s2 + $0x18] sm:$0xff]
      %v808 = vld [vmem:[%s2 + $0x20] sm:$0xff]
      %v809 = vld [vmem:[%s2 + $0x28] sm:$0xff]
      %v810 = vld [vmem:[%s2 + $0x30] sm:$0xff]
      %v811 = vld [vmem:[%s2 + $0x38] sm:$0xff]
      %v812 = vld [vmem:[%s2 + $0x40] sm:$0xff]
      %v813 = vld [vmem:[%s2 + $0x48] sm:$0xff]
      %v814 = vld [vmem:[%s2 + $0x50] sm:$0xff]
      %v815 = vld [vmem:[%s2 + $0x58] sm:$0xff]
      %v816 = vld [vmem:[%s2 + $0x60] sm:$0xff]
      %v817 = vld [vmem:[%s2 + $0x68] sm:$0xff]
      %v818 = vld [vmem:[%s2 + $0x70] sm:$0xff]
      %v819 = vld [vmem:[%s2 + $0x78] sm:$0xff]
      %820 = vmatprep.subr.mxu0 %v367
      %821 = vmatpush1.msra.mxu0 %v366
      %822 = vmatprep.subr.mxu0 %v363
      %823 = vmatpush1.msra.mxu0 %v362
      %824 = vmatprep.subr.mxu0 %v359
      %825 = vmatpush1.msra.mxu0 %v358
      %826 = vmatprep.subr.mxu0 %v355
      %827 = vmatpush1.msra.mxu0 %v354
      %828 = vmatprep.subr.mxu0 %v351
      %829 = vmatpush1.msra.mxu0 %v350
      %830 = vmatprep.subr.mxu0 %v347
      %831 = vmatpush1.msra.mxu0 %v346
      %832 = vmatprep.subr.mxu0 %v343
      %833 = vmatpush1.msra.mxu0 %v342
      %834 = vmatprep.subr.mxu0 %v339
      %835 = vmatpush1.msra.mxu0 %v338
      %836 = vmatprep.subr.mxu0 %v335
      %837 = vmatpush1.msra.mxu0 %v334
      %838 = vmatprep.subr.mxu0 %v331
      %839 = vmatpush1.msra.mxu0 %v330
      %840 = vmatprep.subr.mxu0 %v327
      %841 = vmatpush1.msra.mxu0 %v326
      %842 = vmatprep.subr.mxu0 %v323
      %843 = vmatpush1.msra.mxu0 %v322
      %844 = vmatprep.subr.mxu0 %v319
      %845 = vmatpush1.msra.mxu0 %v318
      %846 = vmatprep.subr.mxu0 %v315
      %847 = vmatpush1.msra.mxu0 %v314
      %848 = vmatprep.subr.mxu0 %v311
      %849 = vmatpush1.msra.mxu0 %v310
      %850 = vmatprep.subr.mxu0 %v307
      %851 = vmatpush1.msra.mxu0 %v306
      %852 = vmatprep.subr.mxu0 0.0
      %853 = vmatpush2.msra.mxu0 0.0
      %854 = vmatprep.subr.mxu0 0.0
      %855 = vmatpush2.msra.mxu0 0.0
      %856 = vmatprep.subr.mxu0 0.0
      %857 = vmatpush2.msra.mxu0 0.0
      %858 = vmatprep.subr.mxu0 0.0
      %859 = vmatpush2.msra.mxu0 0.0
      %860 = vmatprep.subr.mxu0 0.0
      %861 = vmatpush2.msra.mxu0 0.0
      %862 = vmatprep.subr.mxu0 0.0
      %863 = vmatpush2.msra.mxu0 0.0
      %864 = vmatprep.subr.mxu0 0.0
      %865 = vmatpush2.msra.mxu0 0.0
      %866 = vmatprep.subr.mxu0 0.0
      %867 = vmatpush2.msra.mxu0 0.0
      %868 = vmatprep.subr.mxu0 0.0
      %869 = vmatpush2.msra.mxu0 0.0
      %870 = vmatprep.subr.mxu0 0.0
      %871 = vmatpush2.msra.mxu0 0.0
      %872 = vmatprep.subr.mxu0 0.0
      %873 = vmatpush2.msra.mxu0 0.0
      %874 = vmatprep.subr.mxu0 0.0
      %875 = vmatpush2.msra.mxu0 0.0
      %876 = vmatprep.subr.mxu0 0.0
      %877 = vmatpush2.msra.mxu0 0.0
      %878 = vmatprep.subr.mxu0 0.0
      %879 = vmatpush2.msra.mxu0 0.0
      %880 = vmatprep.subr.mxu0 0.0
      %881 = vmatpush2.msra.mxu0 0.0
      %882 = vmatprep.subr.mxu0 0.0
      %883 = vmatpush2.msra.mxu0 0.0
      %884 = vmatprep.mubr.f32.mxu0 0.0
      %885 = vmatmul.mubr.f32.gmra.mxu0 %v804
      %v886 = vpop.f32.mrf.mxu0
      %v887 = vadd.f32 0.0, %v886
      %v888 = vpop.f32.mrf.mxu0
      %v889 = vadd.f32 0.0, %v888
      %890 = vmatprep.mubr.f32.mxu0 0.0
      %891 = vmatmul.mubr.f32.gmra.mxu0 %v805
      %v892 = vpop.f32.mrf.mxu0
      %v893 = vadd.f32 0.0, %v892
      %v894 = vpop.f32.mrf.mxu0
      %v895 = vadd.f32 0.0, %v894
      %896 = vmatprep.mubr.f32.mxu0 0.0
      %897 = vmatmul.mubr.f32.gmra.mxu0 %v806
      %v898 = vpop.f32.mrf.mxu0
      %v899 = vadd.f32 0.0, %v898
      %v900 = vpop.f32.mrf.mxu0
      %v901 = vadd.f32 0.0, %v900
      %902 = vmatprep.mubr.f32.mxu0 0.0
      %903 = vmatmul.mubr.f32.gmra.mxu0 %v807
      %v904 = vpop.f32.mrf.mxu0
      %v905 = vadd.f32 0.0, %v904
      %v906 = vpop.f32.mrf.mxu0
      %v907 = vadd.f32 0.0, %v906
      %908 = vmatprep.mubr.f32.mxu0 0.0
      %909 = vmatmul.mubr.f32.gmra.mxu0 %v808
      %v910 = vpop.f32.mrf.mxu0
      %v911 = vadd.f32 0.0, %v910
      %v912 = vpop.f32.mrf.mxu0
      %v913 = vadd.f32 0.0, %v912
      %914 = vmatprep.mubr.f32.mxu0 0.0
      %915 = vmatmul.mubr.f32.gmra.mxu0 %v809
      %v916 = vpop.f32.mrf.mxu0
      %v917 = vadd.f32 0.0, %v916
      %v918 = vpop.f32.mrf.mxu0
      %v919 = vadd.f32 0.0, %v918
      %920 = vmatprep.mubr.f32.mxu0 0.0
      %921 = vmatmul.mubr.f32.gmra.mxu0 %v810
      %v922 = vpop.f32.mrf.mxu0
      %v923 = vadd.f32 0.0, %v922
      %v924 = vpop.f32.mrf.mxu0
      %v925 = vadd.f32 0.0, %v924
      %926 = vmatprep.mubr.f32.mxu0 0.0
      %927 = vmatmul.mubr.f32.gmra.mxu0 %v811
      %v928 = vpop.f32.mrf.mxu0
      %v929 = vadd.f32 0.0, %v928
      %v930 = vpop.f32.mrf.mxu0
      %v931 = vadd.f32 0.0, %v930
      %932 = vmatprep.mubr.f32.mxu0 0.0
      %933 = vmatmul.mubr.f32.gmra.mxu0 %v812
      %v934 = vpop.f32.mrf.mxu0
      %v935 = vadd.f32 0.0, %v934
      %v936 = vpop.f32.mrf.mxu0
      %v937 = vadd.f32 0.0, %v936
      %938 = vmatprep.mubr.f32.mxu0 0.0
      %939 = vmatmul.mubr.f32.gmra.mxu0 %v813
      %v940 = vpop.f32.mrf.mxu0
      %v941 = vadd.f32 0.0, %v940
      %v942 = vpop.f32.mrf.mxu0
      %v943 = vadd.f32 0.0, %v942
      %944 = vmatprep.mubr.f32.mxu0 0.0
      %945 = vmatmul.mubr.f32.gmra.mxu0 %v814
      %v946 = vpop.f32.mrf.mxu0
      %v947 = vadd.f32 0.0, %v946
      %v948 = vpop.f32.mrf.mxu0
      %v949 = vadd.f32 0.0, %v948
      %950 = vmatprep.mubr.f32.mxu0 0.0
      %951 = vmatmul.mubr.f32.gmra.mxu0 %v815
      %v952 = vpop.f32.mrf.mxu0
      %v953 = vadd.f32 0.0, %v952
      %v954 = vpop.f32.mrf.mxu0
      %v955 = vadd.f32 0.0, %v954
      %956 = vmatprep.mubr.f32.mxu0 0.0
      %957 = vmatmul.mubr.f32.gmra.mxu0 %v816
      %v958 = vpop.f32.mrf.mxu0
      %v959 = vadd.f32 0.0, %v958
      %v960 = vpop.f32.mrf.mxu0
      %v961 = vadd.f32 0.0, %v960
      %962 = vmatprep.mubr.f32.mxu0 0.0
      %963 = vmatmul.mubr.f32.gmra.mxu0 %v817
      %v964 = vpop.f32.mrf.mxu0
      %v965 = vadd.f32 0.0, %v964
      %v966 = vpop.f32.mrf.mxu0
      %v967 = vadd.f32 0.0, %v966
      %968 = vmatprep.mubr.f32.mxu0 0.0
      %969 = vmatmul.mubr.f32.gmra.mxu0 %v818
      %v970 = vpop.f32.mrf.mxu0
      %v971 = vadd.f32 0.0, %v970
      %v972 = vpop.f32.mrf.mxu0
      %v973 = vadd.f32 0.0, %v972
      %974 = vmatprep.mubr.f32.mxu0 0.0
      %975 = vmatmul.mubr.f32.gmra.mxu0 %v819
      %v976 = vpop.f32.mrf.mxu0
      %v977 = vadd.f32 0.0, %v976
      %v978 = vpop.f32.mrf.mxu0
      %v979 = vadd.f32 0.0, %v978
      %980 = vdwg.mxu0
      %981 = vmatprep.subr.mxu0 %v369
      %982 = vmatpush1.msra.mxu0 %v368
      %983 = vmatprep.subr.mxu0 %v365
      %984 = vmatpush1.msra.mxu0 %v364
      %985 = vmatprep.subr.mxu0 %v361
      %986 = vmatpush1.msra.mxu0 %v360
      %987 = vmatprep.subr.mxu0 %v357
      %988 = vmatpush1.msra.mxu0 %v356
      %989 = vmatprep.subr.mxu0 %v353
      %990 = vmatpush1.msra.mxu0 %v352
      %991 = vmatprep.subr.mxu0 %v349
      %992 = vmatpush1.msra.mxu0 %v348
      %993 = vmatprep.subr.mxu0 %v345
      %994 = vmatpush1.msra.mxu0 %v344
      %995 = vmatprep.subr.mxu0 %v341
      %996 = vmatpush1.msra.mxu0 %v340
      %997 = vmatprep.subr.mxu0 %v337
      %998 = vmatpush1.msra.mxu0 %v336
      %999 = vmatprep.subr.mxu0 %v333
      %1000 = vmatpush1.msra.mxu0 %v332
      %1001 = vmatprep.subr.mxu0 %v329
      %1002 = vmatpush1.msra.mxu0 %v328
      %1003 = vmatprep.subr.mxu0 %v325
      %1004 = vmatpush1.msra.mxu0 %v324
      %1005 = vmatprep.subr.mxu0 %v321
      %1006 = vmatpush1.msra.mxu0 %v320
      %1007 = vmatprep.subr.mxu0 %v317
      %1008 = vmatpush1.msra.mxu0 %v316
      %1009 = vmatprep.subr.mxu0 %v313
      %1010 = vmatpush1.msra.mxu0 %v312
      %1011 = vmatprep.subr.mxu0 %v309
      %1012 = vmatpush1.msra.mxu0 %v308
      %1013 = vmatprep.subr.mxu0 0.0
      %1014 = vmatpush2.msra.mxu0 0.0
      %1015 = vmatprep.subr.mxu0 0.0
      %1016 = vmatpush2.msra.mxu0 0.0
      %1017 = vmatprep.subr.mxu0 0.0
      %1018 = vmatpush2.msra.mxu0 0.0
      %1019 = vmatprep.subr.mxu0 0.0
      %1020 = vmatpush2.msra.mxu0 0.0
      %1021 = vmatprep.subr.mxu0 0.0
      %1022 = vmatpush2.msra.mxu0 0.0
      %1023 = vmatprep.subr.mxu0 0.0
      %1024 = vmatpush2.msra.mxu0 0.0
      %1025 = vmatprep.subr.mxu0 0.0
      %1026 = vmatpush2.msra.mxu0 0.0
      %1027 = vmatprep.subr.mxu0 0.0
      %1028 = vmatpush2.msra.mxu0 0.0
      %1029 = vmatprep.subr.mxu0 0.0
      %1030 = vmatpush2.msra.mxu0 0.0
      %1031 = vmatprep.subr.mxu0 0.0
      %1032 = vmatpush2.msra.mxu0 0.0
      %1033 = vmatprep.subr.mxu0 0.0
      %1034 = vmatpush2.msra.mxu0 0.0
      %1035 = vmatprep.subr.mxu0 0.0
      %1036 = vmatpush2.msra.mxu0 0.0
      %1037 = vmatprep.subr.mxu0 0.0
      %1038 = vmatpush2.msra.mxu0 0.0
      %1039 = vmatprep.subr.mxu0 0.0
      %1040 = vmatpush2.msra.mxu0 0.0
      %1041 = vmatprep.subr.mxu0 0.0
      %1042 = vmatpush2.msra.mxu0 0.0
      %1043 = vmatprep.subr.mxu0 0.0
      %1044 = vmatpush2.msra.mxu0 0.0
      %1045 = vmatprep.mubr.f32.mxu0 0.0
      %1046 = vmatmul.mubr.f32.gmra.mxu0 %v804
      %v1047 = vpop.f32.mrf.mxu0
      %v1048 = vadd.f32 0.0, %v1047
      %v1049 = vpop.f32.mrf.mxu0
      %v1050 = vadd.f32 0.0, %v1049
      %1051 = vmatprep.mubr.f32.mxu0 0.0
      %1052 = vmatmul.mubr.f32.gmra.mxu0 %v805
      %v1053 = vpop.f32.mrf.mxu0
      %v1054 = vadd.f32 0.0, %v1053
      %v1055 = vpop.f32.mrf.mxu0
      %v1056 = vadd.f32 0.0, %v1055
      %1057 = vmatprep.mubr.f32.mxu0 0.0
      %1058 = vmatmul.mubr.f32.gmra.mxu0 %v806
      %v1059 = vpop.f32.mrf.mxu0
      %v1060 = vadd.f32 0.0, %v1059
      %v1061 = vpop.f32.mrf.mxu0
      %v1062 = vadd.f32 0.0, %v1061
      %1063 = vmatprep.mubr.f32.mxu0 0.0
      %1064 = vmatmul.mubr.f32.gmra.mxu0 %v807
      %v1065 = vpop.f32.mrf.mxu0
      %v1066 = vadd.f32 0.0, %v1065
      %v1067 = vpop.f32.mrf.mxu0
      %v1068 = vadd.f32 0.0, %v1067
      %1069 = vmatprep.mubr.f32.mxu0 0.0
      %1070 = vmatmul.mubr.f32.gmra.mxu0 %v808
      %v1071 = vpop.f32.mrf.mxu0
      %v1072 = vadd.f32 0.0, %v1071
      %v1073 = vpop.f32.mrf.mxu0
      %v1074 = vadd.f32 0.0, %v1073
      %1075 = vmatprep.mubr.f32.mxu0 0.0
      %1076 = vmatmul.mubr.f32.gmra.mxu0 %v809
      %v1077 = vpop.f32.mrf.mxu0
      %v1078 = vadd.f32 0.0, %v1077
      %v1079 = vpop.f32.mrf.mxu0
      %v1080 = vadd.f32 0.0, %v1079
      %1081 = vmatprep.mubr.f32.mxu0 0.0
      %1082 = vmatmul.mubr.f32.gmra.mxu0 %v810
      %v1083 = vpop.f32.mrf.mxu0
      %v1084 = vadd.f32 0.0, %v1083
      %v1085 = vpop.f32.mrf.mxu0
      %v1086 = vadd.f32 0.0, %v1085
      %1087 = vmatprep.mubr.f32.mxu0 0.0
      %1088 = vmatmul.mubr.f32.gmra.mxu0 %v811
      %v1089 = vpop.f32.mrf.mxu0
      %v1090 = vadd.f32 0.0, %v1089
      %v1091 = vpop.f32.mrf.mxu0
      %v1092 = vadd.f32 0.0, %v1091
      %1093 = vmatprep.mubr.f32.mxu0 0.0
      %1094 = vmatmul.mubr.f32.gmra.mxu0 %v812
      %v1095 = vpop.f32.mrf.mxu0
      %v1096 = vadd.f32 0.0, %v1095
      %v1097 = vpop.f32.mrf.mxu0
      %v1098 = vadd.f32 0.0, %v1097
      %1099 = vmatprep.mubr.f32.mxu0 0.0
      %1100 = vmatmul.mubr.f32.gmra.mxu0 %v813
      %v1101 = vpop.f32.mrf.mxu0
      %v1102 = vadd.f32 0.0, %v1101
      %v1103 = vpop.f32.mrf.mxu0
      %v1104 = vadd.f32 0.0, %v1103
      %1105 = vmatprep.mubr.f32.mxu0 0.0
      %1106 = vmatmul.mubr.f32.gmra.mxu0 %v814
      %v1107 = vpop.f32.mrf.mxu0
      %v1108 = vadd.f32 0.0, %v1107
      %v1109 = vpop.f32.mrf.mxu0
      %v1110 = vadd.f32 0.0, %v1109
      %1111 = vmatprep.mubr.f32.mxu0 0.0
      %1112 = vmatmul.mubr.f32.gmra.mxu0 %v815
      %v1113 = vpop.f32.mrf.mxu0
      %v1114 = vadd.f32 0.0, %v1113
      %v1115 = vpop.f32.mrf.mxu0
      %v1116 = vadd.f32 0.0, %v1115
      %1117 = vmatprep.mubr.f32.mxu0 0.0
      %1118 = vmatmul.mubr.f32.gmra.mxu0 %v816
      %v1119 = vpop.f32.mrf.mxu0
      %v1120 = vadd.f32 0.0, %v1119
      %v1121 = vpop.f32.mrf.mxu0
      %v1122 = vadd.f32 0.0, %v1121
      %1123 = vmatprep.mubr.f32.mxu0 0.0
      %1124 = vmatmul.mubr.f32.gmra.mxu0 %v817
      %v1125 = vpop.f32.mrf.mxu0
      %v1126 = vadd.f32 0.0, %v1125
      %v1127 = vpop.f32.mrf.mxu0
      %v1128 = vadd.f32 0.0, %v1127
      %1129 = vmatprep.mubr.f32.mxu0 0.0
      %1130 = vmatmul.mubr.f32.gmra.mxu0 %v818
      %v1131 = vpop.f32.mrf.mxu0
      %v1132 = vadd.f32 0.0, %v1131
      %v1133 = vpop.f32.mrf.mxu0
      %v1134 = vadd.f32 0.0, %v1133
      %1135 = vmatprep.mubr.f32.mxu0 0.0
      %1136 = vmatmul.mubr.f32.gmra.mxu0 %v819
      %v1137 = vpop.f32.mrf.mxu0
      %v1138 = vadd.f32 0.0, %v1137
      %v1139 = vpop.f32.mrf.mxu0
      %v1140 = vadd.f32 0.0, %v1139
      %1141 = vdwg.mxu0
      %v1142 = vmul.f32 %v549, %v549
      %v1143 = vmul.f32 %v551, %v551
      %v1144 = vmul.f32 %v710, %v710
      %v1145 = vmul.f32 %v712, %v712
      %v1146 = vmul.f32 %v555, %v555
      %v1147 = vmul.f32 %v557, %v557
      %v1148 = vmul.f32 %v716, %v716
      %v1149 = vmul.f32 %v718, %v718
      %v1150 = vmul.f32 %v561, %v561
      %v1151 = vmul.f32 %v563, %v563
      %v1152 = vmul.f32 %v722, %v722
      %v1153 = vmul.f32 %v724, %v724
      %v1154 = vmul.f32 %v567, %v567
      %v1155 = vmul.f32 %v569, %v569
      %v1156 = vmul.f32 %v728, %v728
      %v1157 = vmul.f32 %v730, %v730
      %v1158 = vmul.f32 %v573, %v573
      %v1159 = vmul.f32 %v575, %v575
      %v1160 = vmul.f32 %v734, %v734
      %v1161 = vmul.f32 %v736, %v736
      %v1162 = vmul.f32 %v579, %v579
      %v1163 = vmul.f32 %v581, %v581
      %v1164 = vmul.f32 %v740, %v740
      %v1165 = vmul.f32 %v742, %v742
      %v1166 = vmul.f32 %v585, %v585
      %v1167 = vmul.f32 %v587, %v587
      %v1168 = vmul.f32 %v746, %v746
      %v1169 = vmul.f32 %v748, %v748
      %v1170 = vmul.f32 %v591, %v591
      %v1171 = vmul.f32 %v593, %v593
      %v1172 = vmul.f32 %v752, %v752
      %v1173 = vmul.f32 %v754, %v754
      %v1174 = vmul.f32 %v597, %v597
      %v1175 = vmul.f32 %v599, %v599
      %v1176 = vmul.f32 %v758, %v758
      %v1177 = vmul.f32 %v760, %v760
      %v1178 = vmul.f32 %v603, %v603
      %v1179 = vmul.f32 %v605, %v605
      %v1180 = vmul.f32 %v764, %v764
      %v1181 = vmul.f32 %v766, %v766
      %v1182 = vmul.f32 %v609, %v609
      %v1183 = vmul.f32 %v611, %v611
      %v1184 = vmul.f32 %v770, %v770
      %v1185 = vmul.f32 %v772, %v772
      %v1186 = vmul.f32 %v615, %v615
      %v1187 = vmul.f32 %v617, %v617
      %v1188 = vmul.f32 %v776, %v776
      %v1189 = vmul.f32 %v778, %v778
      %v1190 = vmul.f32 %v621, %v621
      %v1191 = vmul.f32 %v623, %v623
      %v1192 = vmul.f32 %v782, %v782
      %v1193 = vmul.f32 %v784, %v784
      %v1194 = vmul.f32 %v627, %v627
      %v1195 = vmul.f32 %v629, %v629
      %v1196 = vmul.f32 %v788, %v788
      %v1197 = vmul.f32 %v790, %v790
      %v1198 = vmul.f32 %v633, %v633
      %v1199 = vmul.f32 %v635, %v635
      %v1200 = vmul.f32 %v794, %v794
      %v1201 = vmul.f32 %v796, %v796
      %v1202 = vmul.f32 %v639, %v639
      %v1203 = vmul.f32 %v641, %v641
      %v1204 = vmul.f32 %v800, %v800
      %v1205 = vmul.f32 %v802, %v802
      %v1206 = vmul.f32 %v887, %v887
      %v1207 = vmul.f32 %v889, %v889
      %v1208 = vmul.f32 %v1048, %v1048
      %v1209 = vmul.f32 %v1050, %v1050
      %v1210 = vmul.f32 %v893, %v893
      %v1211 = vmul.f32 %v895, %v895
      %v1212 = vmul.f32 %v1054, %v1054
      %v1213 = vmul.f32 %v1056, %v1056
      %v1214 = vmul.f32 %v899, %v899
      %v1215 = vmul.f32 %v901, %v901
      %v1216 = vmul.f32 %v1060, %v1060
      %v1217 = vmul.f32 %v1062, %v1062
      %v1218 = vmul.f32 %v905, %v905
      %v1219 = vmul.f32 %v907, %v907
      %v1220 = vmul.f32 %v1066, %v1066
      %v1221 = vmul.f32 %v1068, %v1068
      %v1222 = vmul.f32 %v911, %v911
      %v1223 = vmul.f32 %v913, %v913
      %v1224 = vmul.f32 %v1072, %v1072
      %v1225 = vmul.f32 %v1074, %v1074
      %v1226 = vmul.f32 %v917, %v917
      %v1227 = vmul.f32 %v919, %v919
      %v1228 = vmul.f32 %v1078, %v1078
      %v1229 = vmul.f32 %v1080, %v1080
      %v1230 = vmul.f32 %v923, %v923
      %v1231 = vmul.f32 %v925, %v925
      %v1232 = vmul.f32 %v1084, %v1084
      %v1233 = vmul.f32 %v1086, %v1086
      %v1234 = vmul.f32 %v929, %v929
      %v1235 = vmul.f32 %v931, %v931
      %v1236 = vmul.f32 %v1090, %v1090
      %v1237 = vmul.f32 %v1092, %v1092
      %v1238 = vmul.f32 %v935, %v935
      %v1239 = vmul.f32 %v937, %v937
      %v1240 = vmul.f32 %v1096, %v1096
      %v1241 = vmul.f32 %v1098, %v1098
      %v1242 = vmul.f32 %v941, %v941
      %v1243 = vmul.f32 %v943, %v943
      %v1244 = vmul.f32 %v1102, %v1102
      %v1245 = vmul.f32 %v1104, %v1104
      %v1246 = vmul.f32 %v947, %v947
      %v1247 = vmul.f32 %v949, %v949
      %v1248 = vmul.f32 %v1108, %v1108
      %v1249 = vmul.f32 %v1110, %v1110
      %v1250 = vmul.f32 %v953, %v953
      %v1251 = vmul.f32 %v955, %v955
      %v1252 = vmul.f32 %v1114, %v1114
      %v1253 = vmul.f32 %v1116, %v1116
      %v1254 = vmul.f32 %v959, %v959
      %v1255 = vmul.f32 %v961, %v961
      %v1256 = vmul.f32 %v1120, %v1120
      %v1257 = vmul.f32 %v1122, %v1122
      %v1258 = vmul.f32 %v965, %v965
      %v1259 = vmul.f32 %v967, %v967
      %v1260 = vmul.f32 %v1126, %v1126
      %v1261 = vmul.f32 %v1128, %v1128
      %v1262 = vmul.f32 %v971, %v971
      %v1263 = vmul.f32 %v973, %v973
      %v1264 = vmul.f32 %v1132, %v1132
      %v1265 = vmul.f32 %v1134, %v1134
      %v1266 = vmul.f32 %v977, %v977
      %v1267 = vmul.f32 %v979, %v979
      %v1268 = vmul.f32 %v1138, %v1138
      %v1269 = vmul.f32 %v1140, %v1140
      %v1270 = vadd.f32 %v1142, %v1206
      %v1271 = vadd.f32 %v1143, %v1207
      %v1272 = vadd.f32 %v1144, %v1208
      %v1273 = vadd.f32 %v1145, %v1209
      %v1274 = vadd.f32 %v1146, %v1210
      %v1275 = vadd.f32 %v1147, %v1211
      %v1276 = vadd.f32 %v1148, %v1212
      %v1277 = vadd.f32 %v1149, %v1213
      %v1278 = vadd.f32 %v1150, %v1214
      %v1279 = vadd.f32 %v1151, %v1215
      %v1280 = vadd.f32 %v1152, %v1216
      %v1281 = vadd.f32 %v1153, %v1217
      %v1282 = vadd.f32 %v1154, %v1218
      %v1283 = vadd.f32 %v1155, %v1219
      %v1284 = vadd.f32 %v1156, %v1220
      %v1285 = vadd.f32 %v1157, %v1221
      %v1286 = vadd.f32 %v1158, %v1222
      %v1287 = vadd.f32 %v1159, %v1223
      %v1288 = vadd.f32 %v1160, %v1224
      %v1289 = vadd.f32 %v1161, %v1225
      %v1290 = vadd.f32 %v1162, %v1226
      %v1291 = vadd.f32 %v1163, %v1227
      %v1292 = vadd.f32 %v1164, %v1228
      %v1293 = vadd.f32 %v1165, %v1229
      %v1294 = vadd.f32 %v1166, %v1230
      %v1295 = vadd.f32 %v1167, %v1231
      %v1296 = vadd.f32 %v1168, %v1232
      %v1297 = vadd.f32 %v1169, %v1233
      %v1298 = vadd.f32 %v1170, %v1234
      %v1299 = vadd.f32 %v1171, %v1235
      %v1300 = vadd.f32 %v1172, %v1236
      %v1301 = vadd.f32 %v1173, %v1237
      %v1302 = vadd.f32 %v1174, %v1238
      %v1303 = vadd.f32 %v1175, %v1239
      %v1304 = vadd.f32 %v1176, %v1240
      %v1305 = vadd.f32 %v1177, %v1241
      %v1306 = vadd.f32 %v1178, %v1242
      %v1307 = vadd.f32 %v1179, %v1243
      %v1308 = vadd.f32 %v1180, %v1244
      %v1309 = vadd.f32 %v1181, %v1245
      %v1310 = vadd.f32 %v1182, %v1246
      %v1311 = vadd.f32 %v1183, %v1247
      %v1312 = vadd.f32 %v1184, %v1248
      %v1313 = vadd.f32 %v1185, %v1249
      %v1314 = vadd.f32 %v1186, %v1250
      %v1315 = vadd.f32 %v1187, %v1251
      %v1316 = vadd.f32 %v1188, %v1252
      %v1317 = vadd.f32 %v1189, %v1253
      %v1318 = vadd.f32 %v1190, %v1254
      %v1319 = vadd.f32 %v1191, %v1255
      %v1320 = vadd.f32 %v1192, %v1256
      %v1321 = vadd.f32 %v1193, %v1257
      %v1322 = vadd.f32 %v1194, %v1258
      %v1323 = vadd.f32 %v1195, %v1259
      %v1324 = vadd.f32 %v1196, %v1260
      %v1325 = vadd.f32 %v1197, %v1261
      %v1326 = vadd.f32 %v1198, %v1262
      %v1327 = vadd.f32 %v1199, %v1263
      %v1328 = vadd.f32 %v1200, %v1264
      %v1329 = vadd.f32 %v1201, %v1265
      %v1330 = vadd.f32 %v1202, %v1266
      %v1331 = vadd.f32 %v1203, %v1267
      %v1332 = vadd.f32 %v1204, %v1268
      %v1333 = vadd.f32 %v1205, %v1269
      %v1334 = vld [vmem:[%s4] sm:$0xff]
      %v1335 = vld [vmem:[%s4 + $0x8] sm:$0xff]
      %v1336 = vld [vmem:[%s4 + $0x10] sm:$0xff]
      %v1337 = vld [vmem:[%s4 + $0x18] sm:$0xff]
      %v1338 = vld [vmem:[%s5] sm:$0xff]
      %v1339 = vld [vmem:[%s5 + $0x8] sm:$0xff]
      %v1340 = vld [vmem:[%s5 + $0x10] sm:$0xff]
      %v1341 = vld [vmem:[%s5 + $0x18] sm:$0xff]
      %1343 = vset.pattern.permute.xlu0 0
      %1344 = vperm.xlu0 %1343, %v1338
      %v1345 = vpop.permute.xlu0 %1344
      %1348 = vset.pattern.permute.xlu0 0
      %1349 = vperm.xlu0 %1348, %v1339
      %v1350 = vpop.permute.xlu0 %1349
      %1353 = vset.pattern.permute.xlu0 0
      %1354 = vperm.xlu0 %1353, %v1340
      %v1355 = vpop.permute.xlu0 %1354
      %1358 = vset.pattern.permute.xlu0 0
      %1359 = vperm.xlu0 %1358, %v1341
      %v1360 = vpop.permute.xlu0 %1359
      %1362 = vmatprep.subr.mxu0 %v1331
      %1363 = vmatpush1.msra.mxu0 %v1330
      %1364 = vmatprep.subr.mxu0 %v1327
      %1365 = vmatpush1.msra.mxu0 %v1326
      %1366 = vmatprep.subr.mxu0 %v1323
      %1367 = vmatpush1.msra.mxu0 %v1322
      %1368 = vmatprep.subr.mxu0 %v1319
      %1369 = vmatpush1.msra.mxu0 %v1318
      %1370 = vmatprep.subr.mxu0 %v1315
      %1371 = vmatpush1.msra.mxu0 %v1314
      %1372 = vmatprep.subr.mxu0 %v1311
      %1373 = vmatpush1.msra.mxu0 %v1310
      %1374 = vmatprep.subr.mxu0 %v1307
      %1375 = vmatpush1.msra.mxu0 %v1306
      %1376 = vmatprep.subr.mxu0 %v1303
      %1377 = vmatpush1.msra.mxu0 %v1302
      %1378 = vmatprep.subr.mxu0 %v1299
      %1379 = vmatpush1.msra.mxu0 %v1298
      %1380 = vmatprep.subr.mxu0 %v1295
      %1381 = vmatpush1.msra.mxu0 %v1294
      %1382 = vmatprep.subr.mxu0 %v1291
      %1383 = vmatpush1.msra.mxu0 %v1290
      %1384 = vmatprep.subr.mxu0 %v1287
      %1385 = vmatpush1.msra.mxu0 %v1286
      %1386 = vmatprep.subr.mxu0 %v1283
      %1387 = vmatpush1.msra.mxu0 %v1282
      %1388 = vmatprep.subr.mxu0 %v1279
      %1389 = vmatpush1.msra.mxu0 %v1278
      %1390 = vmatprep.subr.mxu0 %v1275
      %1391 = vmatpush1.msra.mxu0 %v1274
      %1392 = vmatprep.subr.mxu0 %v1271
      %1393 = vmatpush1.msra.mxu0 %v1270
      %1394 = vmatprep.subr.mxu0 0.0
      %1395 = vmatpush2.msra.mxu0 0.0
      %1396 = vmatprep.subr.mxu0 0.0
      %1397 = vmatpush2.msra.mxu0 0.0
      %1398 = vmatprep.subr.mxu0 0.0
      %1399 = vmatpush2.msra.mxu0 0.0
      %1400 = vmatprep.subr.mxu0 0.0
      %1401 = vmatpush2.msra.mxu0 0.0
      %1402 = vmatprep.subr.mxu0 0.0
      %1403 = vmatpush2.msra.mxu0 0.0
      %1404 = vmatprep.subr.mxu0 0.0
      %1405 = vmatpush2.msra.mxu0 0.0
      %1406 = vmatprep.subr.mxu0 0.0
      %1407 = vmatpush2.msra.mxu0 0.0
      %1408 = vmatprep.subr.mxu0 0.0
      %1409 = vmatpush2.msra.mxu0 0.0
      %1410 = vmatprep.subr.mxu0 0.0
      %1411 = vmatpush2.msra.mxu0 0.0
      %1412 = vmatprep.subr.mxu0 0.0
      %1413 = vmatpush2.msra.mxu0 0.0
      %1414 = vmatprep.subr.mxu0 0.0
      %1415 = vmatpush2.msra.mxu0 0.0
      %1416 = vmatprep.subr.mxu0 0.0
      %1417 = vmatpush2.msra.mxu0 0.0
      %1418 = vmatprep.subr.mxu0 0.0
      %1419 = vmatpush2.msra.mxu0 0.0
      %1420 = vmatprep.subr.mxu0 0.0
      %1421 = vmatpush2.msra.mxu0 0.0
      %1422 = vmatprep.subr.mxu0 0.0
      %1423 = vmatpush2.msra.mxu0 0.0
      %1424 = vmatprep.subr.mxu0 0.0
      %1425 = vmatpush2.msra.mxu0 0.0
      %1426 = vmatprep.mubr.f32.mxu0 0.0
      %1427 = vmatmul.mubr.f32.gmra.mxu0 %v1334
      %v1428 = vpop.f32.mrf.mxu0
      %v1429 = vadd.f32 %v1345, %v1428
      %v1430 = vpop.f32.mrf.mxu0
      %v1431 = vadd.f32 %v1345, %v1430
      %1432 = vmatprep.mubr.f32.mxu0 0.0
      %1433 = vmatmul.mubr.f32.gmra.mxu0 %v1335
      %v1434 = vpop.f32.mrf.mxu0
      %v1435 = vadd.f32 %v1350, %v1434
      %v1436 = vpop.f32.mrf.mxu0
      %v1437 = vadd.f32 %v1350, %v1436
      %1438 = vmatprep.mubr.f32.mxu0 0.0
      %1439 = vmatmul.mubr.f32.gmra.mxu0 %v1336
      %v1440 = vpop.f32.mrf.mxu0
      %v1441 = vadd.f32 %v1355, %v1440
      %v1442 = vpop.f32.mrf.mxu0
      %v1443 = vadd.f32 %v1355, %v1442
      %1444 = vmatprep.mubr.f32.mxu0 0.0
      %1445 = vmatmul.mubr.f32.gmra.mxu0 %v1337
      %v1446 = vpop.f32.mrf.mxu0
      %v1447 = vadd.f32 %v1360, %v1446
      %v1448 = vpop.f32.mrf.mxu0
      %v1449 = vadd.f32 %v1360, %v1448
      %1450 = vdwg.mxu0
      %1451 = vmatprep.subr.mxu0 %v1333
      %1452 = vmatpush1.msra.mxu0 %v1332
      %1453 = vmatprep.subr.mxu0 %v1329
      %1454 = vmatpush1.msra.mxu0 %v1328
      %1455 = vmatprep.subr.mxu0 %v1325
      %1456 = vmatpush1.msra.mxu0 %v1324
      %1457 = vmatprep.subr.mxu0 %v1321
      %1458 = vmatpush1.msra.mxu0 %v1320
      %1459 = vmatprep.subr.mxu0 %v1317
      %1460 = vmatpush1.msra.mxu0 %v1316
      %1461 = vmatprep.subr.mxu0 %v1313
      %1462 = vmatpush1.msra.mxu0 %v1312
      %1463 = vmatprep.subr.mxu0 %v1309
      %1464 = vmatpush1.msra.mxu0 %v1308
      %1465 = vmatprep.subr.mxu0 %v1305
      %1466 = vmatpush1.msra.mxu0 %v1304
      %1467 = vmatprep.subr.mxu0 %v1301
      %1468 = vmatpush1.msra.mxu0 %v1300
      %1469 = vmatprep.subr.mxu0 %v1297
      %1470 = vmatpush1.msra.mxu0 %v1296
      %1471 = vmatprep.subr.mxu0 %v1293
      %1472 = vmatpush1.msra.mxu0 %v1292
      %1473 = vmatprep.subr.mxu0 %v1289
      %1474 = vmatpush1.msra.mxu0 %v1288
      %1475 = vmatprep.subr.mxu0 %v1285
      %1476 = vmatpush1.msra.mxu0 %v1284
      %1477 = vmatprep.subr.mxu0 %v1281
      %1478 = vmatpush1.msra.mxu0 %v1280
      %1479 = vmatprep.subr.mxu0 %v1277
      %1480 = vmatpush1.msra.mxu0 %v1276
      %1481 = vmatprep.subr.mxu0 %v1273
      %1482 = vmatpush1.msra.mxu0 %v1272
      %1483 = vmatprep.subr.mxu0 0.0
      %1484 = vmatpush2.msra.mxu0 0.0
      %1485 = vmatprep.subr.mxu0 0.0
      %1486 = vmatpush2.msra.mxu0 0.0
      %1487 = vmatprep.subr.mxu0 0.0
      %1488 = vmatpush2.msra.mxu0 0.0
      %1489 = vmatprep.subr.mxu0 0.0
      %1490 = vmatpush2.msra.mxu0 0.0
      %1491 = vmatprep.subr.mxu0 0.0
      %1492 = vmatpush2.msra.mxu0 0.0
      %1493 = vmatprep.subr.mxu0 0.0
      %1494 = vmatpush2.msra.mxu0 0.0
      %1495 = vmatprep.subr.mxu0 0.0
      %1496 = vmatpush2.msra.mxu0 0.0
      %1497 = vmatprep.subr.mxu0 0.0
      %1498 = vmatpush2.msra.mxu0 0.0
      %1499 = vmatprep.subr.mxu0 0.0
      %1500 = vmatpush2.msra.mxu0 0.0
      %1501 = vmatprep.subr.mxu0 0.0
      %1502 = vmatpush2.msra.mxu0 0.0
      %1503 = vmatprep.subr.mxu0 0.0
      %1504 = vmatpush2.msra.mxu0 0.0
      %1505 = vmatprep.subr.mxu0 0.0
      %1506 = vmatpush2.msra.mxu0 0.0
      %1507 = vmatprep.subr.mxu0 0.0
      %1508 = vmatpush2.msra.mxu0 0.0
      %1509 = vmatprep.subr.mxu0 0.0
      %1510 = vmatpush2.msra.mxu0 0.0
      %1511 = vmatprep.subr.mxu0 0.0
      %1512 = vmatpush2.msra.mxu0 0.0
      %1513 = vmatprep.subr.mxu0 0.0
      %1514 = vmatpush2.msra.mxu0 0.0
      %1515 = vmatprep.mubr.f32.mxu0 0.0
      %1516 = vmatmul.mubr.f32.gmra.mxu0 %v1334
      %v1517 = vpop.f32.mrf.mxu0
      %v1518 = vadd.f32 %v1345, %v1517
      %v1519 = vpop.f32.mrf.mxu0
      %v1520 = vadd.f32 %v1345, %v1519
      %1521 = vmatprep.mubr.f32.mxu0 0.0
      %1522 = vmatmul.mubr.f32.gmra.mxu0 %v1335
      %v1523 = vpop.f32.mrf.mxu0
      %v1524 = vadd.f32 %v1350, %v1523
      %v1525 = vpop.f32.mrf.mxu0
      %v1526 = vadd.f32 %v1350, %v1525
      %1527 = vmatprep.mubr.f32.mxu0 0.0
      %1528 = vmatmul.mubr.f32.gmra.mxu0 %v1336
      %v1529 = vpop.f32.mrf.mxu0
      %v1530 = vadd.f32 %v1355, %v1529
      %v1531 = vpop.f32.mrf.mxu0
      %v1532 = vadd.f32 %v1355, %v1531
      %1533 = vmatprep.mubr.f32.mxu0 0.0
      %1534 = vmatmul.mubr.f32.gmra.mxu0 %v1337
      %v1535 = vpop.f32.mrf.mxu0
      %v1536 = vadd.f32 %v1360, %v1535
      %v1537 = vpop.f32.mrf.mxu0
      %v1538 = vadd.f32 %v1360, %v1537
      %1539 = vdwg.mxu0
      %vm1540 = vcmp.ge.f32.partialorder %v1429, 0.0
      %vm1541 = vcmp.ge.f32.partialorder %v1431, 0.0
      %vm1542 = vcmp.ge.f32.partialorder %v1518, 0.0
      %vm1543 = vcmp.ge.f32.partialorder %v1520, 0.0
      %vm1544 = vcmp.ge.f32.partialorder %v1435, 0.0
      %vm1545 = vcmp.ge.f32.partialorder %v1437, 0.0
      %vm1546 = vcmp.ge.f32.partialorder %v1524, 0.0
      %vm1547 = vcmp.ge.f32.partialorder %v1526, 0.0
      %vm1548 = vcmp.ge.f32.partialorder %v1441, 0.0
      %vm1549 = vcmp.ge.f32.partialorder %v1443, 0.0
      %vm1550 = vcmp.ge.f32.partialorder %v1530, 0.0
      %vm1551 = vcmp.ge.f32.partialorder %v1532, 0.0
      %vm1552 = vcmp.ge.f32.partialorder %v1447, 0.0
      %vm1553 = vcmp.ge.f32.partialorder %v1449, 0.0
      %vm1554 = vcmp.ge.f32.partialorder %v1536, 0.0
      %vm1555 = vcmp.ge.f32.partialorder %v1538, 0.0
      %v1556 = vsel %vm1540, 1.0, -1.0
      %v1557 = vsel %vm1541, 1.0, -1.0
      %v1558 = vsel %vm1542, 1.0, -1.0
      %v1559 = vsel %vm1543, 1.0, -1.0
      %v1560 = vsel %vm1544, 1.0, -1.0
      %v1561 = vsel %vm1545, 1.0, -1.0
      %v1562 = vsel %vm1546, 1.0, -1.0
      %v1563 = vsel %vm1547, 1.0, -1.0
      %v1564 = vsel %vm1548, 1.0, -1.0
      %v1565 = vsel %vm1549, 1.0, -1.0
      %v1566 = vsel %vm1550, 1.0, -1.0
      %v1567 = vsel %vm1551, 1.0, -1.0
      %v1568 = vsel %vm1552, 1.0, -1.0
      %v1569 = vsel %vm1553, 1.0, -1.0
      %v1570 = vsel %vm1554, 1.0, -1.0
      %v1571 = vsel %vm1555, 1.0, -1.0
      %v1572 = vand.u32 2147483647, %v1429
      %v1573 = vand.u32 2147483647, %v1431
      %v1574 = vand.u32 2147483647, %v1518
      %v1575 = vand.u32 2147483647, %v1520
      %v1576 = vand.u32 2147483647, %v1435
      %v1577 = vand.u32 2147483647, %v1437
      %v1578 = vand.u32 2147483647, %v1524
      %v1579 = vand.u32 2147483647, %v1526
      %v1580 = vand.u32 2147483647, %v1441
      %v1581 = vand.u32 2147483647, %v1443
      %v1582 = vand.u32 2147483647, %v1530
      %v1583 = vand.u32 2147483647, %v1532
      %v1584 = vand.u32 2147483647, %v1447
      %v1585 = vand.u32 2147483647, %v1449
      %v1586 = vand.u32 2147483647, %v1536
      %v1587 = vand.u32 2147483647, %v1538
      %v1588 = vadd.f32 %v1572, 1.0
      %v1589 = vadd.f32 %v1573, 1.0
      %v1590 = vadd.f32 %v1574, 1.0
      %v1591 = vadd.f32 %v1575, 1.0
      %v1592 = vadd.f32 %v1576, 1.0
      %v1593 = vadd.f32 %v1577, 1.0
      %v1594 = vadd.f32 %v1578, 1.0
      %v1595 = vadd.f32 %v1579, 1.0
      %v1596 = vadd.f32 %v1580, 1.0
      %v1597 = vadd.f32 %v1581, 1.0
      %v1598 = vadd.f32 %v1582, 1.0
      %v1599 = vadd.f32 %v1583, 1.0
      %v1600 = vadd.f32 %v1584, 1.0
      %v1601 = vadd.f32 %v1585, 1.0
      %v1602 = vadd.f32 %v1586, 1.0
      %v1603 = vadd.f32 %v1587, 1.0
      %v1604 = vlog2.pop %v1588
      %v1605 = vmul.f32 %v1604, 0.6931472
      %v1606 = vlog2.pop %v1589
      %v1607 = vmul.f32 %v1606, 0.6931472
      %v1608 = vlog2.pop %v1590
      %v1609 = vmul.f32 %v1608, 0.6931472
      %v1610 = vlog2.pop %v1591
      %v1611 = vmul.f32 %v1610, 0.6931472
      %v1612 = vlog2.pop %v1592
      %v1613 = vmul.f32 %v1612, 0.6931472
      %v1614 = vlog2.pop %v1593
      %v1615 = vmul.f32 %v1614, 0.6931472
      %v1616 = vlog2.pop %v1594
      %v1617 = vmul.f32 %v1616, 0.6931472
      %v1618 = vlog2.pop %v1595
      %v1619 = vmul.f32 %v1618, 0.6931472
      %v1620 = vlog2.pop %v1596
      %v1621 = vmul.f32 %v1620, 0.6931472
      %v1622 = vlog2.pop %v1597
      %v1623 = vmul.f32 %v1622, 0.6931472
      %v1624 = vlog2.pop %v1598
      %v1625 = vmul.f32 %v1624, 0.6931472
      %v1626 = vlog2.pop %v1599
      %v1627 = vmul.f32 %v1626, 0.6931472
      %v1628 = vlog2.pop %v1600
      %v1629 = vmul.f32 %v1628, 0.6931472
      %v1630 = vlog2.pop %v1601
      %v1631 = vmul.f32 %v1630, 0.6931472
      %v1632 = vlog2.pop %v1602
      %v1633 = vmul.f32 %v1632, 0.6931472
      %v1634 = vlog2.pop %v1603
      %v1635 = vmul.f32 %v1634, 0.6931472
      %v1636 = vmul.f32 %v1556, %v1605
      %v1637 = vmul.f32 %v1557, %v1607
      %v1638 = vmul.f32 %v1558, %v1609
      %v1639 = vmul.f32 %v1559, %v1611
      %v1640 = vmul.f32 %v1560, %v1613
      %v1641 = vmul.f32 %v1561, %v1615
      %v1642 = vmul.f32 %v1562, %v1617
      %v1643 = vmul.f32 %v1563, %v1619
      %v1644 = vmul.f32 %v1564, %v1621
      %v1645 = vmul.f32 %v1565, %v1623
      %v1646 = vmul.f32 %v1566, %v1625
      %v1647 = vmul.f32 %v1567, %v1627
      %v1648 = vmul.f32 %v1568, %v1629
      %v1649 = vmul.f32 %v1569, %v1631
      %v1650 = vmul.f32 %v1570, %v1633
      %v1651 = vmul.f32 %v1571, %v1635
      %v1652 = vld [vmem:[%s6] sm:$0xff]
      %v1653 = vld [vmem:[%s7] sm:$0xff]
      %1655 = vset.pattern.permute.xlu0 0
      %1656 = vperm.xlu0 %1655, %v1653
      %v1657 = vpop.permute.xlu0 %1656
      %vm1659 = vcmask 261120
      %v1661 = vsel %vm1659, %v1652, 0
      %1663 = vmatprep.subr.mxu0 0.0
      %1664 = vmatpush1.msra.mxu0 0.0
      %1665 = vmatprep.subr.mxu0 0.0
      %1666 = vmatpush1.msra.mxu0 0.0
      %1667 = vmatprep.subr.mxu0 0.0
      %1668 = vmatpush1.msra.mxu0 0.0
      %1669 = vmatprep.subr.mxu0 0.0
      %1670 = vmatpush1.msra.mxu0 0.0
      %1671 = vmatprep.subr.mxu0 0.0
      %1672 = vmatpush1.msra.mxu0 0.0
      %1673 = vmatprep.subr.mxu0 0.0
      %1674 = vmatpush1.msra.mxu0 0.0
      %1675 = vmatprep.subr.mxu0 0.0
      %1676 = vmatpush1.msra.mxu0 0.0
      %1677 = vmatprep.subr.mxu0 0.0
      %1678 = vmatpush1.msra.mxu0 0.0
      %1679 = vmatprep.subr.mxu0 0.0
      %1680 = vmatpush1.msra.mxu0 0.0
      %1681 = vmatprep.subr.mxu0 0.0
      %1682 = vmatpush1.msra.mxu0 0.0
      %1683 = vmatprep.subr.mxu0 0.0
      %1684 = vmatpush1.msra.mxu0 0.0
      %1685 = vmatprep.subr.mxu0 0.0
      %1686 = vmatpush1.msra.mxu0 0.0
      %1687 = vmatprep.subr.mxu0 %v1649
      %1688 = vmatpush1.msra.mxu0 %v1648
      %1689 = vmatprep.subr.mxu0 %v1645
      %1690 = vmatpush1.msra.mxu0 %v1644
      %1691 = vmatprep.subr.mxu0 %v1641
      %1692 = vmatpush1.msra.mxu0 %v1640
      %1693 = vmatprep.subr.mxu0 %v1637
      %1694 = vmatpush1.msra.mxu0 %v1636
      %1695 = vmatprep.subr.mxu0 0.0
      %1696 = vmatpush2.msra.mxu0 0.0
      %1697 = vmatprep.subr.mxu0 0.0
      %1698 = vmatpush2.msra.mxu0 0.0
      %1699 = vmatprep.subr.mxu0 0.0
      %1700 = vmatpush2.msra.mxu0 0.0
      %1701 = vmatprep.subr.mxu0 0.0
      %1702 = vmatpush2.msra.mxu0 0.0
      %1703 = vmatprep.subr.mxu0 0.0
      %1704 = vmatpush2.msra.mxu0 0.0
      %1705 = vmatprep.subr.mxu0 0.0
      %1706 = vmatpush2.msra.mxu0 0.0
      %1707 = vmatprep.subr.mxu0 0.0
      %1708 = vmatpush2.msra.mxu0 0.0
      %1709 = vmatprep.subr.mxu0 0.0
      %1710 = vmatpush2.msra.mxu0 0.0
      %1711 = vmatprep.subr.mxu0 0.0
      %1712 = vmatpush2.msra.mxu0 0.0
      %1713 = vmatprep.subr.mxu0 0.0
      %1714 = vmatpush2.msra.mxu0 0.0
      %1715 = vmatprep.subr.mxu0 0.0
      %1716 = vmatpush2.msra.mxu0 0.0
      %1717 = vmatprep.subr.mxu0 0.0
      %1718 = vmatpush2.msra.mxu0 0.0
      %1719 = vmatprep.subr.mxu0 0.0
      %1720 = vmatpush2.msra.mxu0 0.0
      %1721 = vmatprep.subr.mxu0 0.0
      %1722 = vmatpush2.msra.mxu0 0.0
      %1723 = vmatprep.subr.mxu0 0.0
      %1724 = vmatpush2.msra.mxu0 0.0
      %1725 = vmatprep.subr.mxu0 0.0
      %1726 = vmatpush2.msra.mxu0 0.0
      %1727 = vmatprep.mubr.f32.mxu0 0.0
      %1728 = vmatmul.mubr.f32.gmra.mxu0 %v1661
      %v1729 = vpop.f32.mrf.mxu0
      %v1730 = vadd.f32 %v1657, %v1729
      %v1731 = vpop.f32.mrf.mxu0
      %v1732 = vadd.f32 %v1657, %v1731
      %1733 = vdwg.mxu0
      %1734 = vmatprep.subr.mxu0 0.0
      %1735 = vmatpush1.msra.mxu0 0.0
      %1736 = vmatprep.subr.mxu0 0.0
      %1737 = vmatpush1.msra.mxu0 0.0
      %1738 = vmatprep.subr.mxu0 0.0
      %1739 = vmatpush1.msra.mxu0 0.0
      %1740 = vmatprep.subr.mxu0 0.0
      %1741 = vmatpush1.msra.mxu0 0.0
      %1742 = vmatprep.subr.mxu0 0.0
      %1743 = vmatpush1.msra.mxu0 0.0
      %1744 = vmatprep.subr.mxu0 0.0
      %1745 = vmatpush1.msra.mxu0 0.0
      %1746 = vmatprep.subr.mxu0 0.0
      %1747 = vmatpush1.msra.mxu0 0.0
      %1748 = vmatprep.subr.mxu0 0.0
      %1749 = vmatpush1.msra.mxu0 0.0
      %1750 = vmatprep.subr.mxu0 0.0
      %1751 = vmatpush1.msra.mxu0 0.0
      %1752 = vmatprep.subr.mxu0 0.0
      %1753 = vmatpush1.msra.mxu0 0.0
      %1754 = vmatprep.subr.mxu0 0.0
      %1755 = vmatpush1.msra.mxu0 0.0
      %1756 = vmatprep.subr.mxu0 0.0
      %1757 = vmatpush1.msra.mxu0 0.0
      %1758 = vmatprep.subr.mxu0 %v1651
      %1759 = vmatpush1.msra.mxu0 %v1650
      %1760 = vmatprep.subr.mxu0 %v1647
      %1761 = vmatpush1.msra.mxu0 %v1646
      %1762 = vmatprep.subr.mxu0 %v1643
      %1763 = vmatpush1.msra.mxu0 %v1642
      %1764 = vmatprep.subr.mxu0 %v1639
      %1765 = vmatpush1.msra.mxu0 %v1638
      %1766 = vmatprep.subr.mxu0 0.0
      %1767 = vmatpush2.msra.mxu0 0.0
      %1768 = vmatprep.subr.mxu0 0.0
      %1769 = vmatpush2.msra.mxu0 0.0
      %1770 = vmatprep.subr.mxu0 0.0
      %1771 = vmatpush2.msra.mxu0 0.0
      %1772 = vmatprep.subr.mxu0 0.0
      %1773 = vmatpush2.msra.mxu0 0.0
      %1774 = vmatprep.subr.mxu0 0.0
      %1775 = vmatpush2.msra.mxu0 0.0
      %1776 = vmatprep.subr.mxu0 0.0
      %1777 = vmatpush2.msra.mxu0 0.0
      %1778 = vmatprep.subr.mxu0 0.0
      %1779 = vmatpush2.msra.mxu0 0.0
      %1780 = vmatprep.subr.mxu0 0.0
      %1781 = vmatpush2.msra.mxu0 0.0
      %1782 = vmatprep.subr.mxu0 0.0
      %1783 = vmatpush2.msra.mxu0 0.0
      %1784 = vmatprep.subr.mxu0 0.0
      %1785 = vmatpush2.msra.mxu0 0.0
      %1786 = vmatprep.subr.mxu0 0.0
      %1787 = vmatpush2.msra.mxu0 0.0
      %1788 = vmatprep.subr.mxu0 0.0
      %1789 = vmatpush2.msra.mxu0 0.0
      %1790 = vmatprep.subr.mxu0 0.0
      %1791 = vmatpush2.msra.mxu0 0.0
      %1792 = vmatprep.subr.mxu0 0.0
      %1793 = vmatpush2.msra.mxu0 0.0
      %1794 = vmatprep.subr.mxu0 0.0
      %1795 = vmatpush2.msra.mxu0 0.0
      %1796 = vmatprep.subr.mxu0 0.0
      %1797 = vmatpush2.msra.mxu0 0.0
      %1798 = vmatprep.mubr.f32.mxu0 0.0
      %1799 = vmatmul.mubr.f32.gmra.mxu0 %v1661
      %v1800 = vpop.f32.mrf.mxu0
      %v1801 = vadd.f32 %v1657, %v1800
      %v1802 = vpop.f32.mrf.mxu0
      %v1803 = vadd.f32 %v1657, %v1802
      %1804 = vdwg.mxu0
      %v1805 = vmax.f32 %v1730, 0.0
      %v1806 = vmax.f32 %v1732, 0.0
      %v1807 = vmax.f32 %v1801, 0.0
      %v1808 = vmax.f32 %v1803, 0.0
      %1809 = vst [vmem:[%s305] sm:$0xff] %v1805
      %1810 = vst [vmem:[%s305 + $0x8] sm:$0xff] %v1806
      %1811 = vst [vmem:[%s305 + $0x10] sm:$0xff] %v1807
      %1812 = vst [vmem:[%s305 + $0x18] sm:$0xff] %v1808
      %p1813 = scmp.lt.s32.totalorder %s19, 1
      %s1814 = scalar_select %p1813, %s19, 1
      %s1815 = smul.addr %s1814, 4
      %s1816 = smul.addr %s1815, 8
      %s1817 = scalar_lea.vmem %s8, %s1816
      // Predicated region
      $region53: #{_lambda_.1} parent=51 // pred_check
        %p1818 = pneg %p210
      $region54: #{_lambda_.1} parent=51 // pred_check_branch
        %1820 = sbr.rel (%p1818) target = $region56
      $region55: #{_lambda_.1} parent=51 // pred_region
        _
      $region56: #{_lambda_.1} parent=51 // pred_fallthru
        _
    $region52: #{_lambda_.1} parent=5 // pred_fallthru
      _
    %p1821 = scmp.le.s32.totalorder 2, %s14
    // Predicated region
    $region57: #{_lambda_.1} parent=5 // pred_check
      %p1822 = pneg %p1821
    $region58: #{_lambda_.1} parent=5 // pred_check_branch
      %1824 = sbr.rel (%p1822) target = $region60
    $region59: #{_lambda_.1} parent=5 // pred_region
      %s1825 = ssub.s32 %s14, 2
      // Predicated region
      $region61: #{_lambda_.1} parent=59 // pred_check
        %p1826 = pneg %p216
      $region62: #{_lambda_.1} parent=59 // pred_check_branch
        %1828 = sbr.rel (%p1826) target = $region64
      $region63: #{_lambda_.1} parent=59 // pred_region
        %p1829 = scmp.lt.s32.totalorder %s20, 1
        %s1830 = scalar_select %p1829, %s20, 1
        %s1831 = smul.addr %s1830, 4
        %s1832 = smul.addr %s1831, 8
        %s1833 = scalar_lea.vmem %s8, %s1832
      $region64: #{_lambda_.1} parent=59 // pred_fallthru
        _
    $region60: #{_lambda_.1} parent=5 // pred_fallthru
      _
  $region6: #{_lambda_.1} parent=0 // loop_footer
    %s18 = sadd.s32 1, %s14
  $region7: #{_lambda_.1} parent=0 // loop_footer_branch
    %13 = sbr.rel target = $region3
  $region8: #{_lambda_.1} parent=0 // loop_exit
    _

</llo_original>
